<compile_context>
chip_gen: v6e
topology: v6e:2x2x1
jax: 0.10.0
libtpu: 0.0.40
codegen_flags: <defaults>
</compile_context>

<pallas_src>
import functools

import jax
import jax.numpy as jnp
from jax import lax
from jax.experimental import pallas as pl
from jax.experimental.pallas import tpu as pltpu

NEG_SLOPE = 0.01  # PyTorch LeakyReLU default


def _leaky(v):
    # f32 compare/select on the VPU (safe on v5e, which has no bf16 VPU).
    return jnp.where(v > 0, v, NEG_SLOPE * v)


# --------------------------------------------------------------------------------------
# Kernel A: point_update MLP (tiled over N, fully parallel) + per-tile segment partial sums.
# --------------------------------------------------------------------------------------
def _point_kernel(
    x_ref, seg_ref,
    w1p_ref, b1p_ref, w2p_ref, b2p_ref,       # point_update MLP (weights bf16, biases f32)
    out_ref, partial_ref,                      # outputs: per-point features, per-tile (1,S,d) partial
    *, num_segments,
):
    # ---- point_update: Linear(d, h) -> LeakyReLU -> Linear(h, d) -> LeakyReLU ----
    xb = x_ref[...].astype(jnp.bfloat16)                                        # (NT, d)
    h = _leaky(jnp.dot(xb, w1p_ref[...], preferred_element_type=jnp.float32) + b1p_ref[...])
    out = _leaky(jnp.dot(h.astype(jnp.bfloat16), w2p_ref[...],
                         preferred_element_type=jnp.float32) + b2p_ref[...])    # (NT, d) f32
    out_bf = out.astype(jnp.bfloat16)
    out_ref[...] = out_bf.astype(out_ref.dtype)

    # ---- per-tile one-hot (S, NT) segment reduce on the MXU -> per-tile partial sum ----
    seg_ids = seg_ref[...]                                                      # (1, NT) int32
    seg_iota = lax.broadcasted_iota(jnp.int32, (num_segments, seg_ids.shape[1]), 0)
    # Padded points carry segment id == num_segments and therefore match no row (contribute 0).
    onehot = (seg_ids == seg_iota).astype(jnp.bfloat16)                         # (S, NT)
    psum = jnp.dot(onehot, out_bf, preferred_element_type=jnp.float32)          # (S, d) f32
    partial_ref[...] = psum[None, :, :]


# --------------------------------------------------------------------------------------
# Kernel B (tiny): reduce per-tile partials -> mean scaling -> group_update MLP.
# --------------------------------------------------------------------------------------
def _group_kernel(
    partial_ref, invcnt_ref,
    w1g_ref, b1g_ref, w2g_ref, b2g_ref,        # group_update MLP
    outg_ref,                                   # output: (S, d) group features (bf16)
    grp_acc,                                    # scratch: (S, d) f32 accumulator
    *, agg,
):
    i = pl.program_id(0)

    @pl.when(i == 0)
    def _():
        grp_acc[...] = jnp.zeros_like(grp_acc)

    grp_acc[...] += partial_ref[0]

    @pl.when(i == pl.num_programs(0) - 1)
    def _():
        grp = grp_acc[...]                                                      # (S, d) f32
        if agg == "mean":
            grp = grp * invcnt_ref[...]                                         # (S, 1) broadcast
        gb = grp.astype(jnp.bfloat16)
        hg = _leaky(jnp.dot(gb, w1g_ref[...], preferred_element_type=jnp.float32)
                    + b1g_ref[...])
        og = _leaky(jnp.dot(hg.astype(jnp.bfloat16), w2g_ref[...],
                            preferred_element_type=jnp.float32) + b2g_ref[...])
        outg_ref[...] = og.astype(outg_ref.dtype)


# --------------------------------------------------------------------------------------
# Kernel C: gather group features back to points (transpose-free dot_general over S),
#           single fused K=2d combine matmul, LeakyReLU, + residual.  Fully parallel.
# --------------------------------------------------------------------------------------
def _combine_kernel(
    x_ref, pt_ref, seg_ref, outg_ref,
    wc_ref, bc_ref,
    o_ref,
    *, num_segments,
):
    seg_ids = seg_ref[...]                                                      # (1, NT) int32
    seg_iota = lax.broadcasted_iota(jnp.int32, (num_segments, seg_ids.shape[1]), 0)
    onehot = (seg_ids == seg_iota).astype(jnp.bfloat16)                         # (S, NT)
    outg = outg_ref[...].astype(jnp.bfloat16)                                   # (S, d)

    # gathered[p] = outg[seg2all[p]]  -- contract over S directly, no (NT, S) transpose copy.
    gathered = lax.dot_general(onehot, outg, (((0,), (0,)), ((), ())),
                               preferred_element_type=jnp.float32)              # (NT, d)

    pt = pt_ref[...].astype(jnp.bfloat16)                                       # (NT, d)
    cat = jnp.concatenate([pt, gathered.astype(jnp.bfloat16)], axis=-1)         # (NT, 2d) bf16
    comb = jnp.dot(cat, wc_ref[...], preferred_element_type=jnp.float32) + bc_ref[...]
    o_ref[...] = (_leaky(comb) + x_ref[...].astype(jnp.float32)).astype(o_ref.dtype)


# --------------------------------------------------------------------------------------
# Wrapper
# --------------------------------------------------------------------------------------
def pointnet_block(x, seg2all, all2seg, params, *, num_segments, agg="mean",
                   tile_n=512, interm_dtype=jnp.bfloat16):
    """x: (N, d) float; seg2all: (N,) int segment id per point; all2seg: (S+1,) CSR indptr."""
    if agg not in ("sum", "mean"):
        # TODO(synk): max/min segment reduce not implemented (needs a masked-max kernel path).
        raise NotImplementedError(f"agg={agg!r} not supported; use 'sum' or 'mean'")

    n, d = x.shape
    h = params[0].shape[1]

    # Pad N to a multiple of tile_n; padded points get an out-of-range segment id so they never
    # contribute to any segment sum, and their output rows are sliced off at the end.
    n_pad = int(pl.cdiv(n, tile_n)) * tile_n
    if n_pad != n:
        x_p = jnp.pad(x, ((0, n_pad - n), (0, 0)))
        seg_p = jnp.pad(seg2all.astype(jnp.int32), (0, n_pad - n),
                        constant_values=num_segments)
    else:
        x_p = x
        seg_p = seg2all.astype(jnp.int32)
    seg2d = seg_p.reshape(1, n_pad)
    n_tiles = n_pad // tile_n

    # Segment counts from the CSR indptr (zero vector work in-kernel).
    counts = (all2seg[1:] - all2seg[:-1]).astype(jnp.float32)
    invcnt = (1.0 / jnp.maximum(counts, 1.0)).reshape(num_segments, 1)

    (w1p, b1p, w2p, b2p, w1g, b1g, w2g, b2g, wc, bc) = params
    bf = lambda w: w.astype(jnp.bfloat16)
    w1p_b, w2p_b, w1g_b, w2g_b, wc_b = bf(w1p), bf(w2p), bf(w1g), bf(w2g), bf(wc)

    def const(shp):
        return pl.BlockSpec(shp, lambda i: (0,) * len(shp))

    itemsize_x = x.dtype.itemsize
    itemsize_i = jnp.dtype(interm_dtype).itemsize
    vmem_params = dict(vmem_limit_bytes=32 * 1024 * 1024)

    # ---- Kernel A: point MLP + per-tile segment partial sums (fully parallel) ----
    flops_a = 4 * n_pad * d * h + 2 * num_segments * n_pad * d
    bytes_a = (n_pad * d * itemsize_x + n_pad * 4 + n_pad * d * itemsize_i
               + n_tiles * num_segments * d * 4 + 2 * d * h * 2 + (h + d) * 4)
    out_mid, partials = pl.pallas_call(
        functools.partial(_point_kernel, num_segments=num_segments),
        out_shape=(jax.ShapeDtypeStruct((n_pad, d), interm_dtype),
                   jax.ShapeDtypeStruct((n_tiles, num_segments, d), jnp.float32)),
        grid=(n_tiles,),
        in_specs=[
            pl.BlockSpec((tile_n, d), lambda i: (i, 0)),       # x tile
            pl.BlockSpec((1, tile_n), lambda i: (0, i)),       # segment ids tile
            const(w1p_b.shape), const(b1p.shape), const(w2p_b.shape), const(b2p.shape),
        ],
        out_specs=(pl.BlockSpec((tile_n, d), lambda i: (i, 0)),                 # per-point features
                   pl.BlockSpec((1, num_segments, d), lambda i: (i, 0, 0))),    # per-tile partials
        compiler_params=pltpu.CompilerParams(
            dimension_semantics=("parallel",), **vmem_params),
        cost_estimate=pl.CostEstimate(flops=flops_a, transcendentals=0,
                                      bytes_accessed=bytes_a),
    )(x_p, seg2d, w1p_b, b1p, w2p_b, b2p)

    # ---- Kernel B (tiny): reduce partials, mean scale, group MLP ----
    outg = pl.pallas_call(
        functools.partial(_group_kernel, agg=agg),
        out_shape=jax.ShapeDtypeStruct((num_segments, d), interm_dtype),
        grid=(n_tiles,),
        in_specs=[
            pl.BlockSpec((1, num_segments, d), lambda i: (i, 0, 0)),   # partial tile
            const((num_segments, 1)),                                  # 1/counts
            const(w1g_b.shape), const(b1g.shape), const(w2g_b.shape), const(b2g.shape),
        ],
        out_specs=pl.BlockSpec((num_segments, d), lambda i: (0, 0)),   # resident across tiles
        scratch_shapes=[pltpu.VMEM((num_segments, d), jnp.float32)],
        compiler_params=pltpu.CompilerParams(
            dimension_semantics=("arbitrary",), **vmem_params),
    )(partials, invcnt, w1g_b, b1g, w2g_b, b2g)

    # ---- Kernel C: gather + fused K=2d combine + residual (fully parallel) ----
    flops_c = 2 * num_segments * n_pad * d + 4 * n_pad * d * d
    bytes_c = (n_pad * d * itemsize_x * 2 + n_pad * 4 + n_pad * d * itemsize_i
               + num_segments * d * itemsize_i + 2 * d * d * 2 + d * 4)
    out_full = pl.pallas_call(
        functools.partial(_combine_kernel, num_segments=num_segments),
        out_shape=jax.ShapeDtypeStruct((n_pad, d), x.dtype),
        grid=(n_tiles,),
        in_specs=[
            pl.BlockSpec((tile_n, d), lambda i: (i, 0)),       # x tile (residual)
            pl.BlockSpec((tile_n, d), lambda i: (i, 0)),       # point MLP output tile
            pl.BlockSpec((1, tile_n), lambda i: (0, i)),       # segment ids tile
            const((num_segments, d)),                          # group features (bf16)
            const(wc_b.shape), const(bc.shape),
        ],
        out_specs=pl.BlockSpec((tile_n, d), lambda i: (i, 0)),
        compiler_params=pltpu.CompilerParams(
            dimension_semantics=("parallel",), **vmem_params),
        cost_estimate=pl.CostEstimate(flops=flops_c, transcendentals=0,
                                      bytes_accessed=bytes_c),
    )(x_p, out_mid, seg2d, outg, wc_b, bc)

    return out_full[:n] if n_pad != n else out_full


# --------------------------------------------------------------------------------------
# Pure-JAX reference mirroring the PyTorch forward (eval mode) with the same numerics
# (bf16 matmul operands, f32 accumulation, bf16 intermediates) as the kernels.
# --------------------------------------------------------------------------------------
def _ref_forward(x, seg2all, all2seg, params, *, num_segments, agg="mean"):
    (w1p, b1p, w2p, b2p, w1g, b1g, w2g, b2g, wc, bc) = params

    def mm(a, b):
        return jnp.dot(a.astype(jnp.bfloat16), b.astype(jnp.bfloat16),
                       preferred_element_type=jnp.float32)

    out = _leaky(mm(_leaky(mm(x, w1p) + b1p), w2p) + b2p)
    out_q = out.astype(jnp.bfloat16).astype(jnp.float32)     # kernel reduces the bf16 values
    grp = jax.ops.segment_sum(out_q, seg2all, num_segments=num_segments)
    if agg == "mean":
        cnt = (all2seg[1:] - all2seg[:-1]).astype(jnp.float32)
        grp = grp / jnp.maximum(cnt, 1.0)[:, None]
    outg = _leaky(mm(_leaky(mm(grp, w1g) + b1g), w2g) + b2g)
    outg_q = outg.astype(jnp.bfloat16).astype(jnp.float32)   # kernel emits outg in bf16
    comb = mm(jnp.concatenate([out_q, outg_q[seg2all]], axis=1), wc) + bc
    return _leaky(comb) + x


def init_params(key, d, multiple_factor=2):
    h = d * multiple_factor
    ks = jax.random.split(key, 10)
    s = 0.05
    return (
        s * jax.random.normal(ks[0], (d, h), jnp.float32),      # point_update W1 (in, out)
        s * jax.random.normal(ks[1], (1, h), jnp.float32),      # point_update b1
        s * jax.random.normal(ks[2], (h, d), jnp.float32),      # point_update W2
        s * jax.random.normal(ks[3], (1, d), jnp.float32),      # point_update b2
        s * jax.random.normal(ks[4], (d, h), jnp.float32),      # group_update W1
        s * jax.random.normal(ks[5], (1, h), jnp.float32),      # group_update b1
        s * jax.random.normal(ks[6], (h, d), jnp.float32),      # group_update W2
        s * jax.random.normal(ks[7], (1, d), jnp.float32),      # group_update b2
        s * jax.random.normal(ks[8], (2 * d, d), jnp.float32),  # combine W (stacked [point|group])
        s * jax.random.normal(ks[9], (1, d), jnp.float32),      # combine b
    )


if __name__ == "__main__":
    key = jax.random.PRNGKey(0)
    d = 128                     # feature dim (multiple of 128 -> lane-dense matmuls/stores)
    mf = 2                      # multiple_factor
    agg = "mean"
    tile_n = 512

    # CSR segment structure: 12 segments with varied sizes over 1150 points (3 tiles of 512;
    # segments deliberately cross tile boundaries to exercise the cross-tile partial-sum reduce).
    seg_sizes = jnp.array([40, 171, 9, 300, 35, 164, 50, 115, 77, 88, 60, 41], dtype=jnp.int32)
    all2seg = jnp.concatenate([jnp.zeros((1,), jnp.int32), jnp.cumsum(seg_sizes)])  # indptr
    num_segments = int(all2seg.shape[0]) - 1
    n = int(all2seg[-1])
    seg2all = jnp.repeat(jnp.arange(num_segments, dtype=jnp.int32), seg_sizes,
                         total_repeat_length=n)

    k_x, k_p = jax.random.split(key)
    x = jax.random.normal(k_x, (n, d), jnp.float32)
    params = init_params(k_p, d, mf)

    out = pointnet_block(x, seg2all, all2seg, params,
                         num_segments=num_segments, agg=agg, tile_n=tile_n)
    out = jax.block_until_ready(out)

    ref = _ref_forward(x, seg2all, all2seg, params, num_segments=num_segments, agg=agg)
    assert out.shape == (n, d)
    assert jnp.allclose(out, ref, atol=1e-2, rtol=1e-2), "mismatch vs JAX reference"

    print("KERNEL_OK")
</pallas_src>

<mosaic_0001>
module attributes {stable_mosaic.version = 11 : i64} {
  func.func @_point_kernel(%arg0: i32, %arg1: memref<512x128xf32, #tpu.memory_space<vmem>>, %arg2: memref<1x512xi32, #tpu.memory_space<vmem>>, %arg3: memref<128x256xbf16, #tpu.memory_space<vmem>>, %arg4: memref<1x256xf32, #tpu.memory_space<vmem>>, %arg5: memref<256x128xbf16, #tpu.memory_space<vmem>>, %arg6: memref<1x128xf32, #tpu.memory_space<vmem>>, %arg7: memref<512x128xbf16, #tpu.memory_space<vmem>>, %arg8: memref<1x12x128xf32, #tpu.memory_space<vmem>>) attributes {dimension_semantics = [#tpu.dimension_semantics<parallel>], iteration_bounds = array<i64: 3>, scalar_prefetch = 0 : i64, scratch_operands = 0 : i64, tpu.core_type = #tpu.core_type<tc>, window_params = [{transform_indices = @transform_0, window_bounds = array<i64: 512, 128>}, {transform_indices = @transform_1, window_bounds = array<i64: 1, 512>}, {pipeline_mode = #tpu.pipeline_mode<synchronous>, transform_indices = @transform_2, window_bounds = array<i64: 128, 256>}, {pipeline_mode = #tpu.pipeline_mode<synchronous>, transform_indices = @transform_3, window_bounds = array<i64: 1, 256>}, {pipeline_mode = #tpu.pipeline_mode<synchronous>, transform_indices = @transform_4, window_bounds = array<i64: 256, 128>}, {pipeline_mode = #tpu.pipeline_mode<synchronous>, transform_indices = @transform_5, window_bounds = array<i64: 1, 128>}, {transform_indices = @transform_6, window_bounds = array<i64: 512, 128>}, {transform_indices = @transform_7, window_bounds = array<i64: 1, 12, 128>}]} {
    %c0 = arith.constant 0 : index
    %c0_0 = arith.constant 0 : index
    %0 = vector.load %arg1[%c0, %c0_0] : memref<512x128xf32, #tpu.memory_space<vmem>>, vector<512x128xf32>
    %1 = arith.truncf %0 : vector<512x128xf32> to vector<512x128xbf16>
    %c0_1 = arith.constant 0 : index
    %c0_2 = arith.constant 0 : index
    %2 = vector.load %arg3[%c0_1, %c0_2] : memref<128x256xbf16, #tpu.memory_space<vmem>>, vector<128x256xbf16>
    %cst = arith.constant dense<0.000000e+00> : vector<512x256xf32>
    %3 = tpu.matmul %1, %2, %cst {dimension_numbers = #tpu.dot_dimension_numbers<[1], [0], [0], [1], [0, 0, 1, 1], [], []>} : vector<512x128xbf16>, vector<128x256xbf16>, vector<512x256xf32> -> vector<512x256xf32>
    %c0_3 = arith.constant 0 : index
    %c0_4 = arith.constant 0 : index
    %4 = vector.load %arg4[%c0_3, %c0_4] : memref<1x256xf32, #tpu.memory_space<vmem>>, vector<1x256xf32>
    %5 = vector.broadcast %4 : vector<1x256xf32> to vector<512x256xf32>
    %6 = arith.addf %3, %5 : vector<512x256xf32>
    %cst_5 = arith.constant 0.000000e+00 : f32
    %7 = vector.broadcast %cst_5 : f32 to vector<512x256xf32>
    %8 = arith.cmpf ogt, %6, %7 : vector<512x256xf32>
    %cst_6 = arith.constant 0.00999999977 : f32
    %9 = vector.broadcast %cst_6 : f32 to vector<512x256xf32>
    %10 = arith.mulf %9, %6 : vector<512x256xf32>
    %11 = arith.select %8, %6, %10 : vector<512x256xi1>, vector<512x256xf32>
    %12 = arith.truncf %11 : vector<512x256xf32> to vector<512x256xbf16>
    %c0_7 = arith.constant 0 : index
    %c0_8 = arith.constant 0 : index
    %13 = vector.load %arg5[%c0_7, %c0_8] : memref<256x128xbf16, #tpu.memory_space<vmem>>, vector<256x128xbf16>
    %cst_9 = arith.constant dense<0.000000e+00> : vector<512x128xf32>
    %14 = tpu.matmul %12, %13, %cst_9 {dimension_numbers = #tpu.dot_dimension_numbers<[1], [0], [0], [1], [0, 0, 1, 1], [], []>} : vector<512x256xbf16>, vector<256x128xbf16>, vector<512x128xf32> -> vector<512x128xf32>
    %c0_10 = arith.constant 0 : index
    %c0_11 = arith.constant 0 : index
    %15 = vector.load %arg6[%c0_10, %c0_11] : memref<1x128xf32, #tpu.memory_space<vmem>>, vector<1x128xf32>
    %16 = vector.broadcast %15 : vector<1x128xf32> to vector<512x128xf32>
    %17 = arith.addf %14, %16 : vector<512x128xf32>
    %cst_12 = arith.constant 0.000000e+00 : f32
    %18 = vector.broadcast %cst_12 : f32 to vector<512x128xf32>
    %19 = arith.cmpf ogt, %17, %18 : vector<512x128xf32>
    %cst_13 = arith.constant 0.00999999977 : f32
    %20 = vector.broadcast %cst_13 : f32 to vector<512x128xf32>
    %21 = arith.mulf %20, %17 : vector<512x128xf32>
    %22 = arith.select %19, %17, %21 : vector<512x128xi1>, vector<512x128xf32>
    %23 = arith.truncf %22 : vector<512x128xf32> to vector<512x128xbf16>
    %c0_14 = arith.constant 0 : index
    %c0_15 = arith.constant 0 : index
    %24 = vector.load %arg7[%c0_14, %c0_15] : memref<512x128xbf16, #tpu.memory_space<vmem>>, vector<512x128xbf16>
    tpu.vector_store %arg7[%c0_14, %c0_15], %23 {strides = array<i32>} : memref<512x128xbf16, #tpu.memory_space<vmem>>, vector<512x128xbf16>,
    %c0_16 = arith.constant 0 : index
    %c0_17 = arith.constant 0 : index
    %25 = vector.load %arg2[%c0_16, %c0_17] : memref<1x512xi32, #tpu.memory_space<vmem>>, vector<1x512xi32>
    %26 = tpu.iota {dimensions = array<i32: 0>} : vector<12x512xi32>
    %27 = vector.broadcast %25 : vector<1x512xi32> to vector<12x512xi32>
    %28 = arith.cmpi eq, %27, %26 : vector<12x512xi32>
    %29 = arith.extui %28 : vector<12x512xi1> to vector<12x512xi32>
    %30 = arith.sitofp %29 : vector<12x512xi32> to vector<12x512xf32>
    %31 = arith.truncf %30 : vector<12x512xf32> to vector<12x512xbf16>
    %cst_18 = arith.constant dense<0.000000e+00> : vector<12x128xf32>
    %32 = tpu.matmul %31, %23, %cst_18 {dimension_numbers = #tpu.dot_dimension_numbers<[1], [0], [0], [1], [0, 0, 1, 1], [], []>} : vector<12x512xbf16>, vector<512x128xbf16>, vector<12x128xf32> -> vector<12x128xf32>
    %33 = vector.shape_cast %32 : vector<12x128xf32> to vector<1x12x128xf32>
    %c0_19 = arith.constant 0 : index
    %c0_20 = arith.constant 0 : index
    %c0_21 = arith.constant 0 : index
    %34 = vector.load %arg8[%c0_19, %c0_20, %c0_21] : memref<1x12x128xf32, #tpu.memory_space<vmem>>, vector<1x12x128xf32>
    tpu.vector_store %arg8[%c0_19, %c0_20, %c0_21], %33 {strides = array<i32>} : memref<1x12x128xf32, #tpu.memory_space<vmem>>, vector<1x12x128xf32>,
    return
  }
  func.func @transform_0(%arg0: i32) -> (i32, i32) {
    %c0_i32 = arith.constant 0 : i32
    %c0_i32_0 = arith.constant 0 : i32
    return %arg0, %c0_i32 : i32, i32
  }
  func.func @transform_1(%arg0: i32) -> (i32, i32) {
    %c0_i32 = arith.constant 0 : i32
    %c0_i32_0 = arith.constant 0 : i32
    return %c0_i32, %arg0 : i32, i32
  }
  func.func @transform_2(%arg0: i32) -> (i32, i32) {
    %c0_i32 = arith.constant 0 : i32
    %c0_i32_0 = arith.constant 0 : i32
    %c0_i32_1 = arith.constant 0 : i32
    return %c0_i32, %c0_i32_0 : i32, i32
  }
  func.func @transform_3(%arg0: i32) -> (i32, i32) {
    %c0_i32 = arith.constant 0 : i32
    %c0_i32_0 = arith.constant 0 : i32
    %c0_i32_1 = arith.constant 0 : i32
    return %c0_i32, %c0_i32_0 : i32, i32
  }
  func.func @transform_4(%arg0: i32) -> (i32, i32) {
    %c0_i32 = arith.constant 0 : i32
    %c0_i32_0 = arith.constant 0 : i32
    %c0_i32_1 = arith.constant 0 : i32
    return %c0_i32, %c0_i32_0 : i32, i32
  }
  func.func @transform_5(%arg0: i32) -> (i32, i32) {
    %c0_i32 = arith.constant 0 : i32
    %c0_i32_0 = arith.constant 0 : i32
    %c0_i32_1 = arith.constant 0 : i32
    return %c0_i32, %c0_i32_0 : i32, i32
  }
  func.func @transform_6(%arg0: i32) -> (i32, i32) {
    %c0_i32 = arith.constant 0 : i32
    %c0_i32_0 = arith.constant 0 : i32
    return %arg0, %c0_i32 : i32, i32
  }
  func.func @transform_7(%arg0: i32) -> (i32, i32, i32) {
    %c0_i32 = arith.constant 0 : i32
    %c0_i32_0 = arith.constant 0 : i32
    %c0_i32_1 = arith.constant 0 : i32
    return %arg0, %c0_i32, %c0_i32_0 : i32, i32, i32
  }
}

</mosaic_0001>

<llo_original>
// kernel: tpu_custom_call.1
$region0: #{tpu_custom_call.1}
  #allocation0 [shape = 'u32[]', space=smem, size = 0x4, offset = 0x4, fixed_abs, tag = 'smem constant byte address 0x4 - core index']
  #allocation1 [shape = 'u32[144,128]{1,0:T(1,128)}', space=vmem, size = 0x12000, scoped, tag = 'internal scratch']
  %s0 = inlined_call_operand.hbm [shape: f32[1536,128], index: 0, kind: input, shape index: {}]
  %s1 = inlined_call_operand.hbm [shape: s32[1,1536], index: 1, kind: input, shape index: {}]
  %s2 = inlined_call_operand.hbm [shape: bf16[128,256], index: 2, kind: input, shape index: {}]
  %s3 = inlined_call_operand.vmem [shape: f32[1,256], index: 3, kind: input, shape index: {}]
  %s4 = inlined_call_operand.hbm [shape: bf16[256,128], index: 4, kind: input, shape index: {}]
  %s5 = inlined_call_operand.vmem [shape: f32[1,128], index: 5, kind: input, shape index: {}]
  %s6 = inlined_call_operand.hbm [shape: bf16[1536,128], index: 6, kind: output, shape index: {0}]
  %s7 = inlined_call_operand.hbm [shape: f32[3,12,128], index: 7, kind: output, shape index: {1}]
  %8 = xla_tuple %s6, %s7
  %s9 = sld [smem:[#allocation0]]
  $region81: #{tpu_custom_call.1} parent=0
    _
  %s11 = ssub.s32 1, %s9
  %s12 = scalar_select 0, %s11, %s9
  $region1: #{tpu_custom_call.1} parent=0
    #allocation2 [shape = 'u8[524288]{0}', space=vmem, size = 0x80000, scoped, tag = 'input window, operand 0']
    #allocation3 [shape = 's32[2]{0}', space=sflag, size = 0x8, scoped, tag = 'scoped memory for tpu_custom_call.1']
    #allocation4 [shape = 's32[2]{0}', space=sflag, size = 0x8, scoped, tag = 'scoped memory for tpu_custom_call.1']
    #allocation5 [shape = 'u8[4096]{0}', space=vmem, size = 0x1000, scoped, tag = 'input window, operand 1']
    #allocation6 [shape = 's32[2]{0}', space=sflag, size = 0x8, scoped, tag = 'scoped memory for tpu_custom_call.1']
    #allocation7 [shape = 'u8[65536]{0}', space=vmem, size = 0x10000, scoped, tag = 'input window, operand 2, single buffered']
    #allocation8 [shape = 'u8[65536]{0}', space=vmem, size = 0x10000, scoped, tag = 'input window, operand 4, single buffered']
    #allocation9 [shape = 's32[1]{0}', space=sflag, size = 0x4, scoped, tag = 'scoped memory for tpu_custom_call.1']
    #allocation10 [shape = 'u8[262144]{0}', space=vmem, size = 0x40000, scoped, tag = 'output window, operand 0']
    #allocation11 [shape = 'u8[16384]{0}', space=vmem, size = 0x4000, scoped, tag = 'output window, operand 1']
    #allocation12 [shape = 's32[2]{0}', space=sflag, size = 0x8, scoped, tag = 'scoped memory for tpu_custom_call.1']
    %13 = vsyncpa [#allocation3], 0
    %s14 = scalar_lea.sflag [#allocation3], 1
    %15 = vsyncpa %s14, 0
    %16 = vsyncpa [#allocation6], 0
    %s17 = scalar_lea.sflag [#allocation6], 1
    %18 = vsyncpa %s17, 0
    %19 = vsyncpa [#allocation9], 0
    %20 = vsyncpa [#allocation4], 0
    %s21 = scalar_lea.sflag [#allocation4], 1
    %22 = vsyncpa %s21, 0
    %23 = vsyncpa [#allocation12], 0
    %s24 = scalar_lea.sflag [#allocation12], 1
    %25 = vsyncpa %s24, 0
    loop: start=0, step=1, limit=5
    $region2: #{tpu_custom_call.1} parent=1 // loop_pre_header
      _
    $region3: #{tpu_custom_call.1} parent=1 // loop_header
      %s27 = sphi 0, %s31
      %p28 = scmp.ge.s32.totalorder %s27, 5
      %s37 = sphi 0, %s39
      %s40 = sphi 0, %s37
      %s41 = sphi 0, %s40
      %s57 = sphi 0, %s41
      %s63 = sphi 0, %s65
      %s66 = sphi 0, %s63
      %s67 = sphi 0, %s66
      %s83 = sphi 0, %s67
      %s87 = sphi 0, %s87
      %s89 = sphi 0, %s87
      %s90 = sphi 0, %s89
      %s104 = sphi 0, %s90
      %s108 = sphi 0, %s108
      %s110 = sphi 0, %s108
      %s111 = sphi 0, %s110
      %s125 = sphi 0, %s111
      %s129 = sphi 0, %s129
      %s131 = sphi 0, %s129
      %s132 = sphi 0, %s131
      %s146 = sphi 0, %s132
      %s150 = sphi 0, %s150
      %s152 = sphi 0, %s150
      %s153 = sphi 0, %s152
      %s167 = sphi 0, %s153
      %s173 = sphi 0, %s175
      %s176 = sphi 0, %s173
      %s177 = sphi 0, %s176
      %s193 = sphi 0, %s177
      %s199 = sphi 0, %s201
      %s202 = sphi 0, %s199
      %s203 = sphi 0, %s202
      %s219 = sphi 0, %s203
    $region4: #{tpu_custom_call.1} parent=1 // loop_header_branch
      %30 = sbr.rel (%p28) target = $region8
    $region5: #{tpu_custom_call.1} parent=1 // loop_body
      %s32 = ssub.s32 %s27, 1
      %s33 = ssub.s32 %s27, 2
      %s34 = sadd.s32 %s27, 1
      %s35 = ssub.s32 %s27, %s34
      %p36 = scmp.eq.s32.totalorder %s35, 0
      %s38 = sadd.s32 %s37, 1
      %s39 = scalar_select %p36, %s37, %s38
      %p42 = pneg %p36
      %p43 = scmp.eq.s32.totalorder %s27, 2
      %p44 = por %p42, %p43
      %p45 = scmp.ne.s32.totalorder %s37, %s40
      %p46 = scmp.eq.s32.totalorder %s27, 0
      %p47 = por %p45, %p46
      %p48 = scmp.ne.s32.totalorder %s37, %s40
      %p49 = scmp.eq.s32.totalorder %s32, 2
      %p50 = por %p48, %p49
      %p51 = scmp.ne.s32.totalorder %s40, %s41
      %p52 = scmp.eq.s32.totalorder %s32, 0
      %p53 = por %p51, %p52
      %p54 = scmp.ne.s32.totalorder %s40, %s41
      %p55 = scmp.eq.s32.totalorder %s33, 2
      %p56 = por %p54, %p55
      %p58 = scmp.ne.s32.totalorder %s41, %s57
      %p59 = scmp.eq.s32.totalorder %s33, 0
      %p60 = por %p58, %p59
      %s61 = ssub.s32 %s27, %s34
      %p62 = scmp.eq.s32.totalorder %s61, 0
      %s64 = sadd.s32 %s63, 1
      %s65 = scalar_select %p62, %s63, %s64
      %p68 = pneg %p62
      %p69 = scmp.eq.s32.totalorder %s27, 2
      %p70 = por %p68, %p69
      %p71 = scmp.ne.s32.totalorder %s63, %s66
      %p72 = scmp.eq.s32.totalorder %s27, 0
      %p73 = por %p71, %p72
      %p74 = scmp.ne.s32.totalorder %s63, %s66
      %p75 = scmp.eq.s32.totalorder %s32, 2
      %p76 = por %p74, %p75
      %p77 = scmp.ne.s32.totalorder %s66, %s67
      %p78 = scmp.eq.s32.totalorder %s32, 0
      %p79 = por %p77, %p78
      %p80 = scmp.ne.s32.totalorder %s66, %s67
      %p81 = scmp.eq.s32.totalorder %s33, 2
      %p82 = por %p80, %p81
      %p84 = scmp.ne.s32.totalorder %s67, %s83
      %p85 = scmp.eq.s32.totalorder %s33, 0
      %p86 = por %p84, %p85
      %s88 = sadd.s32 %s87, 1
      %p91 = scmp.eq.s32.totalorder %s27, 2
      %p92 = scmp.ne.s32.totalorder %s87, %s89
      %p93 = scmp.eq.s32.totalorder %s27, 0
      %p94 = por %p92, %p93
      %p95 = scmp.ne.s32.totalorder %s87, %s89
      %p96 = scmp.eq.s32.totalorder %s32, 2
      %p97 = por %p95, %p96
      %p98 = scmp.ne.s32.totalorder %s89, %s90
      %p99 = scmp.eq.s32.totalorder %s32, 0
      %p100 = por %p98, %p99
      %p101 = scmp.ne.s32.totalorder %s89, %s90
      %p102 = scmp.eq.s32.totalorder %s33, 2
      %p103 = por %p101, %p102
      %p105 = scmp.ne.s32.totalorder %s90, %s104
      %p106 = scmp.eq.s32.totalorder %s33, 0
      %p107 = por %p105, %p106
      %s109 = sadd.s32 %s108, 1
      %p112 = scmp.eq.s32.totalorder %s27, 2
      %p113 = scmp.ne.s32.totalorder %s108, %s110
      %p114 = scmp.eq.s32.totalorder %s27, 0
      %p115 = por %p113, %p114
      %p116 = scmp.ne.s32.totalorder %s108, %s110
      %p117 = scmp.eq.s32.totalorder %s32, 2
      %p118 = por %p116, %p117
      %p119 = scmp.ne.s32.totalorder %s110, %s111
      %p120 = scmp.eq.s32.totalorder %s32, 0
      %p121 = por %p119, %p120
      %p122 = scmp.ne.s32.totalorder %s110, %s111
      %p123 = scmp.eq.s32.totalorder %s33, 2
      %p124 = por %p122, %p123
      %p126 = scmp.ne.s32.totalorder %s111, %s125
      %p127 = scmp.eq.s32.totalorder %s33, 0
      %p128 = por %p126, %p127
      %s130 = sadd.s32 %s129, 1
      %p133 = scmp.eq.s32.totalorder %s27, 2
      %p134 = scmp.ne.s32.totalorder %s129, %s131
      %p135 = scmp.eq.s32.totalorder %s27, 0
      %p136 = por %p134, %p135
      %p137 = scmp.ne.s32.totalorder %s129, %s131
      %p138 = scmp.eq.s32.totalorder %s32, 2
      %p139 = por %p137, %p138
      %p140 = scmp.ne.s32.totalorder %s131, %s132
      %p141 = scmp.eq.s32.totalorder %s32, 0
      %p142 = por %p140, %p141
      %p143 = scmp.ne.s32.totalorder %s131, %s132
      %p144 = scmp.eq.s32.totalorder %s33, 2
      %p145 = por %p143, %p144
      %p147 = scmp.ne.s32.totalorder %s132, %s146
      %p148 = scmp.eq.s32.totalorder %s33, 0
      %p149 = por %p147, %p148
      %s151 = sadd.s32 %s150, 1
      %p154 = scmp.eq.s32.totalorder %s27, 2
      %p155 = scmp.ne.s32.totalorder %s150, %s152
      %p156 = scmp.eq.s32.totalorder %s27, 0
      %p157 = por %p155, %p156
      %p158 = scmp.ne.s32.totalorder %s150, %s152
      %p159 = scmp.eq.s32.totalorder %s32, 2
      %p160 = por %p158, %p159
      %p161 = scmp.ne.s32.totalorder %s152, %s153
      %p162 = scmp.eq.s32.totalorder %s32, 0
      %p163 = por %p161, %p162
      %p164 = scmp.ne.s32.totalorder %s152, %s153
      %p165 = scmp.eq.s32.totalorder %s33, 2
      %p166 = por %p164, %p165
      %p168 = scmp.ne.s32.totalorder %s153, %s167
      %p169 = scmp.eq.s32.totalorder %s33, 0
      %p170 = por %p168, %p169
      %s171 = ssub.s32 %s27, %s34
      %p172 = scmp.eq.s32.totalorder %s171, 0
      %s174 = sadd.s32 %s173, 1
      %s175 = scalar_select %p172, %s173, %s174
      %p178 = pneg %p172
      %p179 = scmp.eq.s32.totalorder %s27, 2
      %p180 = por %p178, %p179
      %p181 = scmp.ne.s32.totalorder %s173, %s176
      %p182 = scmp.eq.s32.totalorder %s27, 0
      %p183 = por %p181, %p182
      %p184 = scmp.ne.s32.totalorder %s173, %s176
      %p185 = scmp.eq.s32.totalorder %s32, 2
      %p186 = por %p184, %p185
      %p187 = scmp.ne.s32.totalorder %s176, %s177
      %p188 = scmp.eq.s32.totalorder %s32, 0
      %p189 = por %p187, %p188
      %p190 = scmp.ne.s32.totalorder %s176, %s177
      %p191 = scmp.eq.s32.totalorder %s33, 2
      %p192 = por %p190, %p191
      %p194 = scmp.ne.s32.totalorder %s177, %s193
      %p195 = scmp.eq.s32.totalorder %s33, 0
      %p196 = por %p194, %p195
      %s197 = ssub.s32 %s27, %s34
      %p198 = scmp.eq.s32.totalorder %s197, 0
      %s200 = sadd.s32 %s199, 1
      %s201 = scalar_select %p198, %s199, %s200
      %p204 = pneg %p198
      %p205 = scmp.eq.s32.totalorder %s27, 2
      %p206 = por %p204, %p205
      %p207 = scmp.ne.s32.totalorder %s199, %s202
      %p208 = scmp.eq.s32.totalorder %s27, 0
      %p209 = por %p207, %p208
      %p210 = scmp.ne.s32.totalorder %s199, %s202
      %p211 = scmp.eq.s32.totalorder %s32, 2
      %p212 = por %p210, %p211
      %p213 = scmp.ne.s32.totalorder %s202, %s203
      %p214 = scmp.eq.s32.totalorder %s32, 0
      %p215 = por %p213, %p214
      %p216 = scmp.ne.s32.totalorder %s202, %s203
      %p217 = scmp.eq.s32.totalorder %s33, 2
      %p218 = por %p216, %p217
      %p220 = scmp.ne.s32.totalorder %s203, %s219
      %p221 = scmp.eq.s32.totalorder %s33, 0
      %p222 = por %p220, %p221
      %p223 = scmp.le.s32.totalorder 1, %s27
      %p224 = scmp.lt.s32.totalorder %s27, 4
      %p225 = pnand %p223, %p224
      %p226 = pneg %p225
      // Predicated region
      $region9: #{tpu_custom_call.1} parent=5 // pred_check
        _
      $region10: #{tpu_custom_call.1} parent=5 // pred_check_branch
        %228 = sbr.rel (%p225) target = $region12
      $region11: #{tpu_custom_call.1} parent=5 // pred_region
        %s229 = ssub.s32 %s27, 1
        // Predicated region
        $region13: #{tpu_custom_call.1} parent=11 // pred_check
          %p230 = pneg %p100
        $region14: #{tpu_custom_call.1} parent=11 // pred_check_branch
          %232 = sbr.rel (%p230) target = $region16
        $region15: #{tpu_custom_call.1} parent=11 // pred_region
          %s234 = ssub.s32 2048, 2048
          %235 = vsyncadd [#allocation6], %s234
          %s236 = sshll.u32 [#allocation7], 4
          %s237 = int_to_ptr.vmem [resolvable:$true] %s236
          %242 = dma.hbm_to_vmem [thread:$0]  %s2, 2048, %s237, [#allocation6], 128, 128, 8
        $region16: #{tpu_custom_call.1} parent=11 // pred_fallthru
          _
        // Predicated region
        $region17: #{tpu_custom_call.1} parent=11 // pred_check
          %p243 = pneg %p121
        $region18: #{tpu_custom_call.1} parent=11 // pred_check_branch
          %245 = sbr.rel (%p243) target = $region20
        $region19: #{tpu_custom_call.1} parent=11 // pred_region
          _
        $region20: #{tpu_custom_call.1} parent=11 // pred_fallthru
          _
        // Predicated region
        $region21: #{tpu_custom_call.1} parent=11 // pred_check
          %p246 = pneg %p142
        $region22: #{tpu_custom_call.1} parent=11 // pred_check_branch
          %248 = sbr.rel (%p246) target = $region24
        $region23: #{tpu_custom_call.1} parent=11 // pred_region
          %s250 = ssub.s32 2048, 2048
          %251 = vsyncadd [#allocation9], %s250
          %s252 = sshll.u32 [#allocation8], 4
          %s253 = int_to_ptr.vmem [resolvable:$true] %s252
          %258 = dma.hbm_to_vmem [thread:$0]  %s4, 2048, %s253, [#allocation9], 64, 64, 4
        $region24: #{tpu_custom_call.1} parent=11 // pred_fallthru
          _
        // Predicated region
        $region25: #{tpu_custom_call.1} parent=11 // pred_check
          %p259 = pneg %p163
        $region26: #{tpu_custom_call.1} parent=11 // pred_check_branch
          %261 = sbr.rel (%p259) target = $region28
        $region27: #{tpu_custom_call.1} parent=11 // pred_region
          _
        $region28: #{tpu_custom_call.1} parent=11 // pred_fallthru
          _
      $region12: #{tpu_custom_call.1} parent=5 // pred_fallthru
        _
      %p262 = scmp.lt.s32.totalorder %s27, 3
      // Predicated region
      $region29: #{tpu_custom_call.1} parent=5 // pred_check
        %p263 = pneg %p262
      $region30: #{tpu_custom_call.1} parent=5 // pred_check_branch
        %265 = sbr.rel (%p263) target = $region32
      $region31: #{tpu_custom_call.1} parent=5 // pred_region
        // Predicated region
        $region33: #{tpu_custom_call.1} parent=31 // pred_check
          %p266 = pneg %p47
        $region34: #{tpu_custom_call.1} parent=31 // pred_check_branch
          %268 = sbr.rel (%p266) target = $region36
        $region35: #{tpu_custom_call.1} parent=31 // pred_region
          %s269 = sand.u32 %s37, 1
          %s270 = scalar_lea.sflag [#allocation3], %s269
          %s271 = sand.u32 %s37, 1
          %s272 = smul.addr %s271, 512
          %s273 = scalar_lea.vmem [#allocation2], %s272
          %s274 = smul.u32 64, %s27
          %s276 = ssub.s32 8192, 8192
          %277 = vsyncadd %s270, %s276
          %s278 = smul.addr %s274, 128
          %s279 = scalar_lea.hbm %s0, %s278
          %s280 = sshll.u32 %s273, 4
          %s281 = int_to_ptr.vmem [resolvable:$true] %s280
          %286 = dma.hbm_to_vmem [thread:$0]  %s279, 8192, %s281, %s270, 128, 128, 8
        $region36: #{tpu_custom_call.1} parent=31 // pred_fallthru
          _
        // Predicated region
        $region37: #{tpu_custom_call.1} parent=31 // pred_check
          %p287 = pneg %p73
        $region38: #{tpu_custom_call.1} parent=31 // pred_check_branch
          %289 = sbr.rel (%p287) target = $region40
        $region39: #{tpu_custom_call.1} parent=31 // pred_region
          %s290 = sand.u32 %s27, 1
          %s291 = scalar_lea.sflag [#allocation6], %s290
          %s292 = sand.u32 %s63, 1
          %s293 = smul.addr %s292, 4
          %s294 = scalar_lea.vmem [#allocation5], %s293
          %s295 = smul.u32 4, %s27
          %s297 = ssub.s32 64, 64
          %298 = vsyncadd %s291, %s297
          %s299 = smul.addr %s295, 16
          %s300 = scalar_lea.hbm %s1, %s299
          %s302 = sshll.u32 %s294, 4
          %s303 = int_to_ptr.vmem [resolvable:$true] %s302
          %305 = dma.hbm_to_vmem [thread:$0]  %s300, 64, %s303, %s291
        $region40: #{tpu_custom_call.1} parent=31 // pred_fallthru
          _
      $region32: #{tpu_custom_call.1} parent=5 // pred_fallthru
        _
      %p306 = scmp.le.s32.totalorder 1, %s27
      %p307 = scmp.lt.s32.totalorder %s27, 4
      %p308 = pnand %p306, %p307
      %p309 = pneg %p308
      // Predicated region
      $region41: #{tpu_custom_call.1} parent=5 // pred_check
        _
      $region42: #{tpu_custom_call.1} parent=5 // pred_check_branch
        %311 = sbr.rel (%p308) target = $region44
      $region43: #{tpu_custom_call.1} parent=5 // pred_region
        %s312 = ssub.s32 %s27, 1
        %s313 = sand.u32 %s40, 1
        %s314 = scalar_lea.sflag [#allocation3], %s313
        %s315 = sand.u32 %s40, 1
        %s316 = smul.addr %s315, 512
        %s317 = scalar_lea.vmem [#allocation2], %s316
        // Predicated region
        $region45: #{tpu_custom_call.1} parent=43 // pred_check
          %p318 = pneg %p53
        $region46: #{tpu_custom_call.1} parent=43 // pred_check_branch
          %320 = sbr.rel (%p318) target = $region48
        $region47: #{tpu_custom_call.1} parent=43 // pred_region
          %321 = dma.done %s314, 8192
        $region48: #{tpu_custom_call.1} parent=43 // pred_fallthru
          _
        %s322 = sand.u32 %s32, 1
        %s323 = scalar_lea.sflag [#allocation6], %s322
        %s324 = sand.u32 %s66, 1
        %s325 = smul.addr %s324, 4
        %s326 = scalar_lea.vmem [#allocation5], %s325
        // Predicated region
        $region49: #{tpu_custom_call.1} parent=43 // pred_check
          %p327 = pneg %p79
        $region50: #{tpu_custom_call.1} parent=43 // pred_check_branch
          %329 = sbr.rel (%p327) target = $region52
        $region51: #{tpu_custom_call.1} parent=43 // pred_region
          %330 = dma.done %s323, 64
        $region52: #{tpu_custom_call.1} parent=43 // pred_fallthru
          _
        // Predicated region
        $region53: #{tpu_custom_call.1} parent=43 // pred_check
          %p331 = pneg %p100
        $region54: #{tpu_custom_call.1} parent=43 // pred_check_branch
          %333 = sbr.rel (%p331) target = $region56
        $region55: #{tpu_custom_call.1} parent=43 // pred_region
          %334 = dma.done [#allocation6], 2048
        $region56: #{tpu_custom_call.1} parent=43 // pred_fallthru
          _
        // Predicated region
        $region57: #{tpu_custom_call.1} parent=43 // pred_check
          %p335 = pneg %p142
        $region58: #{tpu_custom_call.1} parent=43 // pred_check_branch
          %337 = sbr.rel (%p335) target = $region60
        $region59: #{tpu_custom_call.1} parent=43 // pred_region
          %338 = dma.done [#allocation9], 2048
        $region60: #{tpu_custom_call.1} parent=43 // pred_fallthru
          _
        %s339 = sand.u32 %s40, 1
        %s340 = scalar_lea.sflag [#allocation3], %s339
        %s341 = sand.u32 %s40, 1
        %s342 = smul.addr %s341, 512
        %s343 = scalar_lea.vmem [#allocation2], %s342
        %p344 = pneg %p53
        %p345 = pneg %p50
        %s346 = sand.u32 %s32, 1
        %s347 = scalar_lea.sflag [#allocation6], %s346
        %s348 = sand.u32 %s66, 1
        %s349 = smul.addr %s348, 4
        %s350 = scalar_lea.vmem [#allocation5], %s349
        %p351 = pneg %p79
        %p352 = pneg %p76
        %p353 = pneg %p100
        %p354 = pneg %p97
        %p355 = pneg %p121
        %p356 = pneg %p118
        %p357 = pneg %p142
        %p358 = pneg %p139
        %p359 = pneg %p163
        %p360 = pneg %p160
        %p361 = pneg %p189
        %p362 = pneg %p186
        %s363 = sand.u32 %s176, 1
        %s364 = scalar_lea.sflag [#allocation4], %s363
        %s365 = sand.u32 %s176, 1
        %s366 = smul.addr %s365, 256
        %s367 = scalar_lea.vmem [#allocation10], %s366
        %p368 = pneg %p215
        %p369 = pneg %p212
        %s370 = sand.u32 %s202, 1
        %s371 = scalar_lea.sflag [#allocation12], %s370
        %s372 = sand.u32 %s202, 1
        %s373 = smul.addr %s372, 16
        %s374 = scalar_lea.vmem [#allocation11], %s373
        %s375 = smul.u32 64, %s32
        %s376 = smul.u32 4, %s32
        %s377 = smul.u32 64, %s32
        %v379 = vld [vmem:[%s317] sm:$0xff]
        %v380 = vld [vmem:[%s317 + $0x8] sm:$0xff]
        %v381 = vld [vmem:[%s317 + $0x10] sm:$0xff]
        %v382 = vld [vmem:[%s317 + $0x18] sm:$0xff]
        %v383 = vld [vmem:[%s317 + $0x20] sm:$0xff]
        %v384 = vld [vmem:[%s317 + $0x28] sm:$0xff]
        %v385 = vld [vmem:[%s317 + $0x30] sm:$0xff]
        %v386 = vld [vmem:[%s317 + $0x38] sm:$0xff]
        %v387 = vld [vmem:[%s317 + $0x40] sm:$0xff]
        %v388 = vld [vmem:[%s317 + $0x48] sm:$0xff]
        %v389 = vld [vmem:[%s317 + $0x50] sm:$0xff]
        %v390 = vld [vmem:[%s317 + $0x58] sm:$0xff]
        %v391 = vld [vmem:[%s317 + $0x60] sm:$0xff]
        %v392 = vld [vmem:[%s317 + $0x68] sm:$0xff]
        %v393 = vld [vmem:[%s317 + $0x70] sm:$0xff]
        %v394 = vld [vmem:[%s317 + $0x78] sm:$0xff]
        %v395 = vld [vmem:[%s317 + $0x80] sm:$0xff]
        %v396 = vld [vmem:[%s317 + $0x88] sm:$0xff]
        %v397 = vld [vmem:[%s317 + $0x90] sm:$0xff]
        %v398 = vld [vmem:[%s317 + $0x98] sm:$0xff]
        %v399 = vld [vmem:[%s317 + $0xa0] sm:$0xff]
        %v400 = vld [vmem:[%s317 + $0xa8] sm:$0xff]
        %v401 = vld [vmem:[%s317 + $0xb0] sm:$0xff]
        %v402 = vld [vmem:[%s317 + $0xb8] sm:$0xff]
        %v403 = vld [vmem:[%s317 + $0xc0] sm:$0xff]
        %v404 = vld [vmem:[%s317 + $0xc8] sm:$0xff]
        %v405 = vld [vmem:[%s317 + $0xd0] sm:$0xff]
        %v406 = vld [vmem:[%s317 + $0xd8] sm:$0xff]
        %v407 = vld [vmem:[%s317 + $0xe0] sm:$0xff]
        %v408 = vld [vmem:[%s317 + $0xe8] sm:$0xff]
        %v409 = vld [vmem:[%s317 + $0xf0] sm:$0xff]
        %v410 = vld [vmem:[%s317 + $0xf8] sm:$0xff]
        %v411 = vld [vmem:[%s317 + $0x100] sm:$0xff]
        %v412 = vld [vmem:[%s317 + $0x108] sm:$0xff]
        %v413 = vld [vmem:[%s317 + $0x110] sm:$0xff]
        %v414 = vld [vmem:[%s317 + $0x118] sm:$0xff]
        %v415 = vld [vmem:[%s317 + $0x120] sm:$0xff]
        %v416 = vld [vmem:[%s317 + $0x128] sm:$0xff]
        %v417 = vld [vmem:[%s317 + $0x130] sm:$0xff]
        %v418 = vld [vmem:[%s317 + $0x138] sm:$0xff]
        %v419 = vld [vmem:[%s317 + $0x140] sm:$0xff]
        %v420 = vld [vmem:[%s317 + $0x148] sm:$0xff]
        %v421 = vld [vmem:[%s317 + $0x150] sm:$0xff]
        %v422 = vld [vmem:[%s317 + $0x158] sm:$0xff]
        %v423 = vld [vmem:[%s317 + $0x160] sm:$0xff]
        %v424 = vld [vmem:[%s317 + $0x168] sm:$0xff]
        %v425 = vld [vmem:[%s317 + $0x170] sm:$0xff]
        %v426 = vld [vmem:[%s317 + $0x178] sm:$0xff]
        %v427 = vld [vmem:[%s317 + $0x180] sm:$0xff]
        %v428 = vld [vmem:[%s317 + $0x188] sm:$0xff]
        %v429 = vld [vmem:[%s317 + $0x190] sm:$0xff]
        %v430 = vld [vmem:[%s317 + $0x198] sm:$0xff]
        %v431 = vld [vmem:[%s317 + $0x1a0] sm:$0xff]
        %v432 = vld [vmem:[%s317 + $0x1a8] sm:$0xff]
        %v433 = vld [vmem:[%s317 + $0x1b0] sm:$0xff]
        %v434 = vld [vmem:[%s317 + $0x1b8] sm:$0xff]
        %v435 = vld [vmem:[%s317 + $0x1c0] sm:$0xff]
        %v436 = vld [vmem:[%s317 + $0x1c8] sm:$0xff]
        %v437 = vld [vmem:[%s317 + $0x1d0] sm:$0xff]
        %v438 = vld [vmem:[%s317 + $0x1d8] sm:$0xff]
        %v439 = vld [vmem:[%s317 + $0x1e0] sm:$0xff]
        %v440 = vld [vmem:[%s317 + $0x1e8] sm:$0xff]
        %v441 = vld [vmem:[%s317 + $0x1f0] sm:$0xff]
        %v442 = vld [vmem:[%s317 + $0x1f8] sm:$0xff]
        %v443 = vpack.c.bf16 %v380, %v379
        %v444 = vpack.c.bf16 %v382, %v381
        %v445 = vpack.c.bf16 %v384, %v383
        %v446 = vpack.c.bf16 %v386, %v385
        %v447 = vpack.c.bf16 %v388, %v387
        %v448 = vpack.c.bf16 %v390, %v389
        %v449 = vpack.c.bf16 %v392, %v391
        %v450 = vpack.c.bf16 %v394, %v393
        %v451 = vpack.c.bf16 %v396, %v395
        %v452 = vpack.c.bf16 %v398, %v397
        %v453 = vpack.c.bf16 %v400, %v399
        %v454 = vpack.c.bf16 %v402, %v401
        %v455 = vpack.c.bf16 %v404, %v403
        %v456 = vpack.c.bf16 %v406, %v405
        %v457 = vpack.c.bf16 %v408, %v407
        %v458 = vpack.c.bf16 %v410, %v409
        %v459 = vpack.c.bf16 %v412, %v411
        %v460 = vpack.c.bf16 %v414, %v413
        %v461 = vpack.c.bf16 %v416, %v415
        %v462 = vpack.c.bf16 %v418, %v417
        %v463 = vpack.c.bf16 %v420, %v419
        %v464 = vpack.c.bf16 %v422, %v421
        %v465 = vpack.c.bf16 %v424, %v423
        %v466 = vpack.c.bf16 %v426, %v425
        %v467 = vpack.c.bf16 %v428, %v427
        %v468 = vpack.c.bf16 %v430, %v429
        %v469 = vpack.c.bf16 %v432, %v431
        %v470 = vpack.c.bf16 %v434, %v433
        %v471 = vpack.c.bf16 %v436, %v435
        %v472 = vpack.c.bf16 %v438, %v437
        %v473 = vpack.c.bf16 %v440, %v439
        %v474 = vpack.c.bf16 %v442, %v441
        %v475 = vld [vmem:[#allocation7] sm:$0xff]
        %v476 = vld [vmem:[#allocation7 + $0x8] sm:$0xff]
        %v477 = vld [vmem:[#allocation7 + $0x10] sm:$0xff]
        %v478 = vld [vmem:[#allocation7 + $0x18] sm:$0xff]
        %v479 = vld [vmem:[#allocation7 + $0x20] sm:$0xff]
        %v480 = vld [vmem:[#allocation7 + $0x28] sm:$0xff]
        %v481 = vld [vmem:[#allocation7 + $0x30] sm:$0xff]
        %v482 = vld [vmem:[#allocation7 + $0x38] sm:$0xff]
        %v483 = vld [vmem:[#allocation7 + $0x40] sm:$0xff]
        %v484 = vld [vmem:[#allocation7 + $0x48] sm:$0xff]
        %v485 = vld [vmem:[#allocation7 + $0x50] sm:$0xff]
        %v486 = vld [vmem:[#allocation7 + $0x58] sm:$0xff]
        %v487 = vld [vmem:[#allocation7 + $0x60] sm:$0xff]
        %v488 = vld [vmem:[#allocation7 + $0x68] sm:$0xff]
        %v489 = vld [vmem:[#allocation7 + $0x70] sm:$0xff]
        %v490 = vld [vmem:[#allocation7 + $0x78] sm:$0xff]
        %v491 = vld [vmem:[%s3] sm:$0x3]
        %v493 = vlaneseq
        %v494 = vshrl.u32 %v493, 7
        %v495 = vsub.s32 0, %v494
        %v496 = vrot.slane %v491, %v495
        %v497 = vlaneseq
        %v498 = vshrl.u32 %v497, 7
        %v499 = vsub.s32 1, %v498
        %v500 = vrot.slane %v491, %v499
        %v519 = vunpack.c.l.b16 %v475
        %v520 = vunpack.c.h.b16 %v475
        %v521 = vunpack.c.l.b16 %v476
        %v522 = vunpack.c.h.b16 %v476
        %v523 = vunpack.c.l.b16 %v477
        %v524 = vunpack.c.h.b16 %v477
        %v525 = vunpack.c.l.b16 %v478
        %v526 = vunpack.c.h.b16 %v478
        %v527 = vunpack.c.l.b16 %v479
        %v528 = vunpack.c.h.b16 %v479
        %v529 = vunpack.c.l.b16 %v480
        %v530 = vunpack.c.h.b16 %v480
        %v531 = vunpack.c.l.b16 %v481
        %v532 = vunpack.c.h.b16 %v481
        %v533 = vunpack.c.l.b16 %v482
        %v534 = vunpack.c.h.b16 %v482
        %v535 = vunpack.c.l.b16 %v483
        %v536 = vunpack.c.h.b16 %v483
        %v537 = vunpack.c.l.b16 %v484
        %v538 = vunpack.c.h.b16 %v484
        %v539 = vunpack.c.l.b16 %v485
        %v540 = vunpack.c.h.b16 %v485
        %v541 = vunpack.c.l.b16 %v486
        %v542 = vunpack.c.h.b16 %v486
        %v543 = vunpack.c.l.b16 %v487
        %v544 = vunpack.c.h.b16 %v487
        %v545 = vunpack.c.l.b16 %v488
        %v546 = vunpack.c.h.b16 %v488
        %v547 = vunpack.c.l.b16 %v489
        %v548 = vunpack.c.h.b16 %v489
        %v549 = vunpack.c.l.b16 %v490
        %v550 = vunpack.c.h.b16 %v490
        %v551 = vpack.c.b16 %v521, %v519
        %v552 = vpack.c.b16 %v522, %v520
        %v553 = vpack.c.b16 %v525, %v523
        %v554 = vpack.c.b16 %v526, %v524
        %v555 = vpack.c.b16 %v529, %v527
        %v556 = vpack.c.b16 %v530, %v528
        %v557 = vpack.c.b16 %v533, %v531
        %v558 = vpack.c.b16 %v534, %v532
        %v559 = vpack.c.b16 %v537, %v535
        %v560 = vpack.c.b16 %v538, %v536
        %v561 = vpack.c.b16 %v541, %v539
        %v562 = vpack.c.b16 %v542, %v540
        %v563 = vpack.c.b16 %v545, %v543
        %v564 = vpack.c.b16 %v546, %v544
        %v565 = vpack.c.b16 %v549, %v547
        %v566 = vpack.c.b16 %v550, %v548
        %583 = vmatprep.subr.bf16.mxu0 %v566
        %584 = vmatpush1.bf16.msra.mxu0 %v565
        %585 = vmatprep.subr.bf16.mxu0 %v564
        %586 = vmatpush1.bf16.msra.mxu0 %v563
        %587 = vmatprep.subr.bf16.mxu0 %v562
        %588 = vmatpush1.bf16.msra.mxu0 %v561
        %589 = vmatprep.subr.bf16.mxu0 %v560
        %590 = vmatpush1.bf16.msra.mxu0 %v559
        %591 = vmatprep.subr.bf16.mxu0 %v558
        %592 = vmatpush1.bf16.msra.mxu0 %v557
        %593 = vmatprep.subr.bf16.mxu0 %v556
        %594 = vmatpush1.bf16.msra.mxu0 %v555
        %595 = vmatprep.subr.bf16.mxu0 %v554
        %596 = vmatpush1.bf16.msra.mxu0 %v553
        %597 = vmatprep.subr.bf16.mxu0 %v552
        %598 = vmatpush1.bf16.msra.mxu0 %v551
        %599 = vmatprep.subr.bf16.mxu0 0
        %600 = vmatpush2.bf16.msra.mxu0 0
        %601 = vmatprep.subr.bf16.mxu0 0
        %602 = vmatpush2.bf16.msra.mxu0 0
        %603 = vmatprep.subr.bf16.mxu0 0
        %604 = vmatpush2.bf16.msra.mxu0 0
        %605 = vmatprep.subr.bf16.mxu0 0
        %606 = vmatpush2.bf16.msra.mxu0 0
        %607 = vmatprep.subr.bf16.mxu0 0
        %608 = vmatpush2.bf16.msra.mxu0 0
        %609 = vmatprep.subr.bf16.mxu0 0
        %610 = vmatpush2.bf16.msra.mxu0 0
        %611 = vmatprep.subr.bf16.mxu0 0
        %612 = vmatpush2.bf16.msra.mxu0 0
        %613 = vmatprep.subr.bf16.mxu0 0
        %614 = vmatpush2.bf16.msra.mxu0 0
        %615 = vmatprep.mubr.bf16.mxu0 0
        %616 = vmatmul.mubr.bf16.gmra.mxu0 %v443
        %v617 = vpop.f32.mrf.mxu0
        %v618 = vadd.f32 %v496, %v617
        %v619 = vpop.f32.mrf.mxu0
        %v620 = vadd.f32 %v500, %v619
        %v621 = vpop.f32.mrf.mxu0
        %v622 = vadd.f32 %v496, %v621
        %v623 = vpop.f32.mrf.mxu0
        %v624 = vadd.f32 %v500, %v623
        %625 = vmatprep.mubr.bf16.mxu0 0
        %626 = vmatmul.mubr.bf16.gmra.mxu0 %v444
        %v627 = vpop.f32.mrf.mxu0
        %v628 = vadd.f32 %v496, %v627
        %v629 = vpop.f32.mrf.mxu0
        %v630 = vadd.f32 %v500, %v629
        %v631 = vpop.f32.mrf.mxu0
        %v632 = vadd.f32 %v496, %v631
        %v633 = vpop.f32.mrf.mxu0
        %v634 = vadd.f32 %v500, %v633
        %635 = vmatprep.mubr.bf16.mxu0 0
        %636 = vmatmul.mubr.bf16.gmra.mxu0 %v445
        %v637 = vpop.f32.mrf.mxu0
        %v638 = vadd.f32 %v496, %v637
        %v639 = vpop.f32.mrf.mxu0
        %v640 = vadd.f32 %v500, %v639
        %v641 = vpop.f32.mrf.mxu0
        %v642 = vadd.f32 %v496, %v641
        %v643 = vpop.f32.mrf.mxu0
        %v644 = vadd.f32 %v500, %v643
        %645 = vmatprep.mubr.bf16.mxu0 0
        %646 = vmatmul.mubr.bf16.gmra.mxu0 %v446
        %v647 = vpop.f32.mrf.mxu0
        %v648 = vadd.f32 %v496, %v647
        %v649 = vpop.f32.mrf.mxu0
        %v650 = vadd.f32 %v500, %v649
        %v651 = vpop.f32.mrf.mxu0
        %v652 = vadd.f32 %v496, %v651
        %v653 = vpop.f32.mrf.mxu0
        %v654 = vadd.f32 %v500, %v653
        %655 = vmatprep.mubr.bf16.mxu0 0
        %656 = vmatmul.mubr.bf16.gmra.mxu0 %v447
        %v657 = vpop.f32.mrf.mxu0
        %v658 = vadd.f32 %v496, %v657
        %v659 = vpop.f32.mrf.mxu0
        %v660 = vadd.f32 %v500, %v659
        %v661 = vpop.f32.mrf.mxu0
        %v662 = vadd.f32 %v496, %v661
        %v663 = vpop.f32.mrf.mxu0
        %v664 = vadd.f32 %v500, %v663
        %665 = vmatprep.mubr.bf16.mxu0 0
        %666 = vmatmul.mubr.bf16.gmra.mxu0 %v448
        %v667 = vpop.f32.mrf.mxu0
        %v668 = vadd.f32 %v496, %v667
        %v669 = vpop.f32.mrf.mxu0
        %v670 = vadd.f32 %v500, %v669
        %v671 = vpop.f32.mrf.mxu0
        %v672 = vadd.f32 %v496, %v671
        %v673 = vpop.f32.mrf.mxu0
        %v674 = vadd.f32 %v500, %v673
        %675 = vmatprep.mubr.bf16.mxu0 0
        %676 = vmatmul.mubr.bf16.gmra.mxu0 %v449
        %v677 = vpop.f32.mrf.mxu0
        %v678 = vadd.f32 %v496, %v677
        %v679 = vpop.f32.mrf.mxu0
        %v680 = vadd.f32 %v500, %v679
        %v681 = vpop.f32.mrf.mxu0
        %v682 = vadd.f32 %v496, %v681
        %v683 = vpop.f32.mrf.mxu0
        %v684 = vadd.f32 %v500, %v683
        %685 = vmatprep.mubr.bf16.mxu0 0
        %686 = vmatmul.mubr.bf16.gmra.mxu0 %v450
        %v687 = vpop.f32.mrf.mxu0
        %v688 = vadd.f32 %v496, %v687
        %v689 = vpop.f32.mrf.mxu0
        %v690 = vadd.f32 %v500, %v689
        %v691 = vpop.f32.mrf.mxu0
        %v692 = vadd.f32 %v496, %v691
        %v693 = vpop.f32.mrf.mxu0
        %v694 = vadd.f32 %v500, %v693
        %695 = vmatprep.mubr.bf16.mxu0 0
        %696 = vmatmul.mubr.bf16.gmra.mxu0 %v451
        %v697 = vpop.f32.mrf.mxu0
        %v698 = vadd.f32 %v496, %v697
        %v699 = vpop.f32.mrf.mxu0
        %v700 = vadd.f32 %v500, %v699
        %v701 = vpop.f32.mrf.mxu0
        %v702 = vadd.f32 %v496, %v701
        %v703 = vpop.f32.mrf.mxu0
        %v704 = vadd.f32 %v500, %v703
        %705 = vmatprep.mubr.bf16.mxu0 0
        %706 = vmatmul.mubr.bf16.gmra.mxu0 %v452
        %v707 = vpop.f32.mrf.mxu0
        %v708 = vadd.f32 %v496, %v707
        %v709 = vpop.f32.mrf.mxu0
        %v710 = vadd.f32 %v500, %v709
        %v711 = vpop.f32.mrf.mxu0
        %v712 = vadd.f32 %v496, %v711
        %v713 = vpop.f32.mrf.mxu0
        %v714 = vadd.f32 %v500, %v713
        %715 = vmatprep.mubr.bf16.mxu0 0
        %716 = vmatmul.mubr.bf16.gmra.mxu0 %v453
        %v717 = vpop.f32.mrf.mxu0
        %v718 = vadd.f32 %v496, %v717
        %v719 = vpop.f32.mrf.mxu0
        %v720 = vadd.f32 %v500, %v719
        %v721 = vpop.f32.mrf.mxu0
        %v722 = vadd.f32 %v496, %v721
        %v723 = vpop.f32.mrf.mxu0
        %v724 = vadd.f32 %v500, %v723
        %725 = vmatprep.mubr.bf16.mxu0 0
        %726 = vmatmul.mubr.bf16.gmra.mxu0 %v454
        %v727 = vpop.f32.mrf.mxu0
        %v728 = vadd.f32 %v496, %v727
        %v729 = vpop.f32.mrf.mxu0
        %v730 = vadd.f32 %v500, %v729
        %v731 = vpop.f32.mrf.mxu0
        %v732 = vadd.f32 %v496, %v731
        %v733 = vpop.f32.mrf.mxu0
        %v734 = vadd.f32 %v500, %v733
        %735 = vmatprep.mubr.bf16.mxu0 0
        %736 = vmatmul.mubr.bf16.gmra.mxu0 %v455
        %v737 = vpop.f32.mrf.mxu0
        %v738 = vadd.f32 %v496, %v737
        %v739 = vpop.f32.mrf.mxu0
        %v740 = vadd.f32 %v500, %v739
        %v741 = vpop.f32.mrf.mxu0
        %v742 = vadd.f32 %v496, %v741
        %v743 = vpop.f32.mrf.mxu0
        %v744 = vadd.f32 %v500, %v743
        %745 = vmatprep.mubr.bf16.mxu0 0
        %746 = vmatmul.mubr.bf16.gmra.mxu0 %v456
        %v747 = vpop.f32.mrf.mxu0
        %v748 = vadd.f32 %v496, %v747
        %v749 = vpop.f32.mrf.mxu0
        %v750 = vadd.f32 %v500, %v749
        %v751 = vpop.f32.mrf.mxu0
        %v752 = vadd.f32 %v496, %v751
        %v753 = vpop.f32.mrf.mxu0
        %v754 = vadd.f32 %v500, %v753
        %755 = vmatprep.mubr.bf16.mxu0 0
        %756 = vmatmul.mubr.bf16.gmra.mxu0 %v457
        %v757 = vpop.f32.mrf.mxu0
        %v758 = vadd.f32 %v496, %v757
        %v759 = vpop.f32.mrf.mxu0
        %v760 = vadd.f32 %v500, %v759
        %v761 = vpop.f32.mrf.mxu0
        %v762 = vadd.f32 %v496, %v761
        %v763 = vpop.f32.mrf.mxu0
        %v764 = vadd.f32 %v500, %v763
        %765 = vmatprep.mubr.bf16.mxu0 0
        %766 = vmatmul.mubr.bf16.gmra.mxu0 %v458
        %v767 = vpop.f32.mrf.mxu0
        %v768 = vadd.f32 %v496, %v767
        %v769 = vpop.f32.mrf.mxu0
        %v770 = vadd.f32 %v500, %v769
        %v771 = vpop.f32.mrf.mxu0
        %v772 = vadd.f32 %v496, %v771
        %v773 = vpop.f32.mrf.mxu0
        %v774 = vadd.f32 %v500, %v773
        %775 = vmatprep.mubr.bf16.mxu0 0
        %776 = vmatmul.mubr.bf16.gmra.mxu0 %v459
        %v777 = vpop.f32.mrf.mxu0
        %v778 = vadd.f32 %v496, %v777
        %v779 = vpop.f32.mrf.mxu0
        %v780 = vadd.f32 %v500, %v779
        %v781 = vpop.f32.mrf.mxu0
        %v782 = vadd.f32 %v496, %v781
        %v783 = vpop.f32.mrf.mxu0
        %v784 = vadd.f32 %v500, %v783
        %785 = vmatprep.mubr.bf16.mxu0 0
        %786 = vmatmul.mubr.bf16.gmra.mxu0 %v460
        %v787 = vpop.f32.mrf.mxu0
        %v788 = vadd.f32 %v496, %v787
        %v789 = vpop.f32.mrf.mxu0
        %v790 = vadd.f32 %v500, %v789
        %v791 = vpop.f32.mrf.mxu0
        %v792 = vadd.f32 %v496, %v791
        %v793 = vpop.f32.mrf.mxu0
        %v794 = vadd.f32 %v500, %v793
        %795 = vmatprep.mubr.bf16.mxu0 0
        %796 = vmatmul.mubr.bf16.gmra.mxu0 %v461
        %v797 = vpop.f32.mrf.mxu0
        %v798 = vadd.f32 %v496, %v797
        %v799 = vpop.f32.mrf.mxu0
        %v800 = vadd.f32 %v500, %v799
        %v801 = vpop.f32.mrf.mxu0
        %v802 = vadd.f32 %v496, %v801
        %v803 = vpop.f32.mrf.mxu0
        %v804 = vadd.f32 %v500, %v803
        %805 = vmatprep.mubr.bf16.mxu0 0
        %806 = vmatmul.mubr.bf16.gmra.mxu0 %v462
        %v807 = vpop.f32.mrf.mxu0
        %v808 = vadd.f32 %v496, %v807
        %v809 = vpop.f32.mrf.mxu0
        %v810 = vadd.f32 %v500, %v809
        %v811 = vpop.f32.mrf.mxu0
        %v812 = vadd.f32 %v496, %v811
        %v813 = vpop.f32.mrf.mxu0
        %v814 = vadd.f32 %v500, %v813
        %815 = vmatprep.mubr.bf16.mxu0 0
        %816 = vmatmul.mubr.bf16.gmra.mxu0 %v463
        %v817 = vpop.f32.mrf.mxu0
        %v818 = vadd.f32 %v496, %v817
        %v819 = vpop.f32.mrf.mxu0
        %v820 = vadd.f32 %v500, %v819
        %v821 = vpop.f32.mrf.mxu0
        %v822 = vadd.f32 %v496, %v821
        %v823 = vpop.f32.mrf.mxu0
        %v824 = vadd.f32 %v500, %v823
        %825 = vmatprep.mubr.bf16.mxu0 0
        %826 = vmatmul.mubr.bf16.gmra.mxu0 %v464
        %v827 = vpop.f32.mrf.mxu0
        %v828 = vadd.f32 %v496, %v827
        %v829 = vpop.f32.mrf.mxu0
        %v830 = vadd.f32 %v500, %v829
        %v831 = vpop.f32.mrf.mxu0
        %v832 = vadd.f32 %v496, %v831
        %v833 = vpop.f32.mrf.mxu0
        %v834 = vadd.f32 %v500, %v833
        %835 = vmatprep.mubr.bf16.mxu0 0
        %836 = vmatmul.mubr.bf16.gmra.mxu0 %v465
        %v837 = vpop.f32.mrf.mxu0
        %v838 = vadd.f32 %v496, %v837
        %v839 = vpop.f32.mrf.mxu0
        %v840 = vadd.f32 %v500, %v839
        %v841 = vpop.f32.mrf.mxu0
        %v842 = vadd.f32 %v496, %v841
        %v843 = vpop.f32.mrf.mxu0
        %v844 = vadd.f32 %v500, %v843
        %845 = vmatprep.mubr.bf16.mxu0 0
        %846 = vmatmul.mubr.bf16.gmra.mxu0 %v466
        %v847 = vpop.f32.mrf.mxu0
        %v848 = vadd.f32 %v496, %v847
        %v849 = vpop.f32.mrf.mxu0
        %v850 = vadd.f32 %v500, %v849
        %v851 = vpop.f32.mrf.mxu0
        %v852 = vadd.f32 %v496, %v851
        %v853 = vpop.f32.mrf.mxu0
        %v854 = vadd.f32 %v500, %v853
        %855 = vmatprep.mubr.bf16.mxu0 0
        %856 = vmatmul.mubr.bf16.gmra.mxu0 %v467
        %v857 = vpop.f32.mrf.mxu0
        %v858 = vadd.f32 %v496, %v857
        %v859 = vpop.f32.mrf.mxu0
        %v860 = vadd.f32 %v500, %v859
        %v861 = vpop.f32.mrf.mxu0
        %v862 = vadd.f32 %v496, %v861
        %v863 = vpop.f32.mrf.mxu0
        %v864 = vadd.f32 %v500, %v863
        %865 = vmatprep.mubr.bf16.mxu0 0
        %866 = vmatmul.mubr.bf16.gmra.mxu0 %v468
        %v867 = vpop.f32.mrf.mxu0
        %v868 = vadd.f32 %v496, %v867
        %v869 = vpop.f32.mrf.mxu0
        %v870 = vadd.f32 %v500, %v869
        %v871 = vpop.f32.mrf.mxu0
        %v872 = vadd.f32 %v496, %v871
        %v873 = vpop.f32.mrf.mxu0
        %v874 = vadd.f32 %v500, %v873
        %875 = vmatprep.mubr.bf16.mxu0 0
        %876 = vmatmul.mubr.bf16.gmra.mxu0 %v469
        %v877 = vpop.f32.mrf.mxu0
        %v878 = vadd.f32 %v496, %v877
        %v879 = vpop.f32.mrf.mxu0
        %v880 = vadd.f32 %v500, %v879
        %v881 = vpop.f32.mrf.mxu0
        %v882 = vadd.f32 %v496, %v881
        %v883 = vpop.f32.mrf.mxu0
        %v884 = vadd.f32 %v500, %v883
        %885 = vmatprep.mubr.bf16.mxu0 0
        %886 = vmatmul.mubr.bf16.gmra.mxu0 %v470
        %v887 = vpop.f32.mrf.mxu0
        %v888 = vadd.f32 %v496, %v887
        %v889 = vpop.f32.mrf.mxu0
        %v890 = vadd.f32 %v500, %v889
        %v891 = vpop.f32.mrf.mxu0
        %v892 = vadd.f32 %v496, %v891
        %v893 = vpop.f32.mrf.mxu0
        %v894 = vadd.f32 %v500, %v893
        %895 = vmatprep.mubr.bf16.mxu0 0
        %896 = vmatmul.mubr.bf16.gmra.mxu0 %v471
        %v897 = vpop.f32.mrf.mxu0
        %v898 = vadd.f32 %v496, %v897
        %v899 = vpop.f32.mrf.mxu0
        %v900 = vadd.f32 %v500, %v899
        %v901 = vpop.f32.mrf.mxu0
        %v902 = vadd.f32 %v496, %v901
        %v903 = vpop.f32.mrf.mxu0
        %v904 = vadd.f32 %v500, %v903
        %905 = vmatprep.mubr.bf16.mxu0 0
        %906 = vmatmul.mubr.bf16.gmra.mxu0 %v472
        %v907 = vpop.f32.mrf.mxu0
        %v908 = vadd.f32 %v496, %v907
        %v909 = vpop.f32.mrf.mxu0
        %v910 = vadd.f32 %v500, %v909
        %v911 = vpop.f32.mrf.mxu0
        %v912 = vadd.f32 %v496, %v911
        %v913 = vpop.f32.mrf.mxu0
        %v914 = vadd.f32 %v500, %v913
        %915 = vmatprep.mubr.bf16.mxu0 0
        %916 = vmatmul.mubr.bf16.gmra.mxu0 %v473
        %v917 = vpop.f32.mrf.mxu0
        %v918 = vadd.f32 %v496, %v917
        %v919 = vpop.f32.mrf.mxu0
        %v920 = vadd.f32 %v500, %v919
        %v921 = vpop.f32.mrf.mxu0
        %v922 = vadd.f32 %v496, %v921
        %v923 = vpop.f32.mrf.mxu0
        %v924 = vadd.f32 %v500, %v923
        %925 = vmatprep.mubr.bf16.mxu0 0
        %926 = vmatmul.mubr.bf16.gmra.mxu0 %v474
        %v927 = vpop.f32.mrf.mxu0
        %v928 = vadd.f32 %v496, %v927
        %v929 = vpop.f32.mrf.mxu0
        %v930 = vadd.f32 %v500, %v929
        %v931 = vpop.f32.mrf.mxu0
        %v932 = vadd.f32 %v496, %v931
        %v933 = vpop.f32.mrf.mxu0
        %v934 = vadd.f32 %v500, %v933
        %935 = vdwg.mxu0
        %vm936 = vcmp.gt.f32.partialorder %v618, 0.0
        %vm937 = vcmp.gt.f32.partialorder %v620, 0.0
        %vm938 = vcmp.gt.f32.partialorder %v622, 0.0
        %vm939 = vcmp.gt.f32.partialorder %v624, 0.0
        %vm940 = vcmp.gt.f32.partialorder %v628, 0.0
        %vm941 = vcmp.gt.f32.partialorder %v630, 0.0
        %vm942 = vcmp.gt.f32.partialorder %v632, 0.0
        %vm943 = vcmp.gt.f32.partialorder %v634, 0.0
        %vm944 = vcmp.gt.f32.partialorder %v638, 0.0
        %vm945 = vcmp.gt.f32.partialorder %v640, 0.0
        %vm946 = vcmp.gt.f32.partialorder %v642, 0.0
        %vm947 = vcmp.gt.f32.partialorder %v644, 0.0
        %vm948 = vcmp.gt.f32.partialorder %v648, 0.0
        %vm949 = vcmp.gt.f32.partialorder %v650, 0.0
        %vm950 = vcmp.gt.f32.partialorder %v652, 0.0
        %vm951 = vcmp.gt.f32.partialorder %v654, 0.0
        %vm952 = vcmp.gt.f32.partialorder %v658, 0.0
        %vm953 = vcmp.gt.f32.partialorder %v660, 0.0
        %vm954 = vcmp.gt.f32.partialorder %v662, 0.0
        %vm955 = vcmp.gt.f32.partialorder %v664, 0.0
        %vm956 = vcmp.gt.f32.partialorder %v668, 0.0
        %vm957 = vcmp.gt.f32.partialorder %v670, 0.0
        %vm958 = vcmp.gt.f32.partialorder %v672, 0.0
        %vm959 = vcmp.gt.f32.partialorder %v674, 0.0
        %vm960 = vcmp.gt.f32.partialorder %v678, 0.0
        %vm961 = vcmp.gt.f32.partialorder %v680, 0.0
        %vm962 = vcmp.gt.f32.partialorder %v682, 0.0
        %vm963 = vcmp.gt.f32.partialorder %v684, 0.0
        %vm964 = vcmp.gt.f32.partialorder %v688, 0.0
        %vm965 = vcmp.gt.f32.partialorder %v690, 0.0
        %vm966 = vcmp.gt.f32.partialorder %v692, 0.0
        %vm967 = vcmp.gt.f32.partialorder %v694, 0.0
        %vm968 = vcmp.gt.f32.partialorder %v698, 0.0
        %vm969 = vcmp.gt.f32.partialorder %v700, 0.0
        %vm970 = vcmp.gt.f32.partialorder %v702, 0.0
        %vm971 = vcmp.gt.f32.partialorder %v704, 0.0
        %vm972 = vcmp.gt.f32.partialorder %v708, 0.0
        %vm973 = vcmp.gt.f32.partialorder %v710, 0.0
        %vm974 = vcmp.gt.f32.partialorder %v712, 0.0
        %vm975 = vcmp.gt.f32.partialorder %v714, 0.0
        %vm976 = vcmp.gt.f32.partialorder %v718, 0.0
        %vm977 = vcmp.gt.f32.partialorder %v720, 0.0
        %vm978 = vcmp.gt.f32.partialorder %v722, 0.0
        %vm979 = vcmp.gt.f32.partialorder %v724, 0.0
        %vm980 = vcmp.gt.f32.partialorder %v728, 0.0
        %vm981 = vcmp.gt.f32.partialorder %v730, 0.0
        %vm982 = vcmp.gt.f32.partialorder %v732, 0.0
        %vm983 = vcmp.gt.f32.partialorder %v734, 0.0
        %vm984 = vcmp.gt.f32.partialorder %v738, 0.0
        %vm985 = vcmp.gt.f32.partialorder %v740, 0.0
        %vm986 = vcmp.gt.f32.partialorder %v742, 0.0
        %vm987 = vcmp.gt.f32.partialorder %v744, 0.0
        %vm988 = vcmp.gt.f32.partialorder %v748, 0.0
        %vm989 = vcmp.gt.f32.partialorder %v750, 0.0
        %vm990 = vcmp.gt.f32.partialorder %v752, 0.0
        %vm991 = vcmp.gt.f32.partialorder %v754, 0.0
        %vm992 = vcmp.gt.f32.partialorder %v758, 0.0
        %vm993 = vcmp.gt.f32.partialorder %v760, 0.0
        %vm994 = vcmp.gt.f32.partialorder %v762, 0.0
        %vm995 = vcmp.gt.f32.partialorder %v764, 0.0
        %vm996 = vcmp.gt.f32.partialorder %v768, 0.0
        %vm997 = vcmp.gt.f32.partialorder %v770, 0.0
        %vm998 = vcmp.gt.f32.partialorder %v772, 0.0
        %vm999 = vcmp.gt.f32.partialorder %v774, 0.0
        %vm1000 = vcmp.gt.f32.partialorder %v778, 0.0
        %vm1001 = vcmp.gt.f32.partialorder %v780, 0.0
        %vm1002 = vcmp.gt.f32.partialorder %v782, 0.0
        %vm1003 = vcmp.gt.f32.partialorder %v784, 0.0
        %vm1004 = vcmp.gt.f32.partialorder %v788, 0.0
        %vm1005 = vcmp.gt.f32.partialorder %v790, 0.0
        %vm1006 = vcmp.gt.f32.partialorder %v792, 0.0
        %vm1007 = vcmp.gt.f32.partialorder %v794, 0.0
        %vm1008 = vcmp.gt.f32.partialorder %v798, 0.0
        %vm1009 = vcmp.gt.f32.partialorder %v800, 0.0
        %vm1010 = vcmp.gt.f32.partialorder %v802, 0.0
        %vm1011 = vcmp.gt.f32.partialorder %v804, 0.0
        %vm1012 = vcmp.gt.f32.partialorder %v808, 0.0
        %vm1013 = vcmp.gt.f32.partialorder %v810, 0.0
        %vm1014 = vcmp.gt.f32.partialorder %v812, 0.0
        %vm1015 = vcmp.gt.f32.partialorder %v814, 0.0
        %vm1016 = vcmp.gt.f32.partialorder %v818, 0.0
        %vm1017 = vcmp.gt.f32.partialorder %v820, 0.0
        %vm1018 = vcmp.gt.f32.partialorder %v822, 0.0
        %vm1019 = vcmp.gt.f32.partialorder %v824, 0.0
        %vm1020 = vcmp.gt.f32.partialorder %v828, 0.0
        %vm1021 = vcmp.gt.f32.partialorder %v830, 0.0
        %vm1022 = vcmp.gt.f32.partialorder %v832, 0.0
        %vm1023 = vcmp.gt.f32.partialorder %v834, 0.0
        %vm1024 = vcmp.gt.f32.partialorder %v838, 0.0
        %vm1025 = vcmp.gt.f32.partialorder %v840, 0.0
        %vm1026 = vcmp.gt.f32.partialorder %v842, 0.0
        %vm1027 = vcmp.gt.f32.partialorder %v844, 0.0
        %vm1028 = vcmp.gt.f32.partialorder %v848, 0.0
        %vm1029 = vcmp.gt.f32.partialorder %v850, 0.0
        %vm1030 = vcmp.gt.f32.partialorder %v852, 0.0
        %vm1031 = vcmp.gt.f32.partialorder %v854, 0.0
        %vm1032 = vcmp.gt.f32.partialorder %v858, 0.0
        %vm1033 = vcmp.gt.f32.partialorder %v860, 0.0
        %vm1034 = vcmp.gt.f32.partialorder %v862, 0.0
        %vm1035 = vcmp.gt.f32.partialorder %v864, 0.0
        %vm1036 = vcmp.gt.f32.partialorder %v868, 0.0
        %vm1037 = vcmp.gt.f32.partialorder %v870, 0.0
        %vm1038 = vcmp.gt.f32.partialorder %v872, 0.0
        %vm1039 = vcmp.gt.f32.partialorder %v874, 0.0
        %vm1040 = vcmp.gt.f32.partialorder %v878, 0.0
        %vm1041 = vcmp.gt.f32.partialorder %v880, 0.0
        %vm1042 = vcmp.gt.f32.partialorder %v882, 0.0
        %vm1043 = vcmp.gt.f32.partialorder %v884, 0.0
        %vm1044 = vcmp.gt.f32.partialorder %v888, 0.0
        %vm1045 = vcmp.gt.f32.partialorder %v890, 0.0
        %vm1046 = vcmp.gt.f32.partialorder %v892, 0.0
        %vm1047 = vcmp.gt.f32.partialorder %v894, 0.0
        %vm1048 = vcmp.gt.f32.partialorder %v898, 0.0
        %vm1049 = vcmp.gt.f32.partialorder %v900, 0.0
        %vm1050 = vcmp.gt.f32.partialorder %v902, 0.0
        %vm1051 = vcmp.gt.f32.partialorder %v904, 0.0
        %vm1052 = vcmp.gt.f32.partialorder %v908, 0.0
        %vm1053 = vcmp.gt.f32.partialorder %v910, 0.0
        %vm1054 = vcmp.gt.f32.partialorder %v912, 0.0
        %vm1055 = vcmp.gt.f32.partialorder %v914, 0.0
        %vm1056 = vcmp.gt.f32.partialorder %v918, 0.0
        %vm1057 = vcmp.gt.f32.partialorder %v920, 0.0
        %vm1058 = vcmp.gt.f32.partialorder %v922, 0.0
        %vm1059 = vcmp.gt.f32.partialorder %v924, 0.0
        %vm1060 = vcmp.gt.f32.partialorder %v928, 0.0
        %vm1061 = vcmp.gt.f32.partialorder %v930, 0.0
        %vm1062 = vcmp.gt.f32.partialorder %v932, 0.0
        %vm1063 = vcmp.gt.f32.partialorder %v934, 0.0
        %v1064 = vmul.f32 %v618, 0.01
        %v1065 = vmul.f32 %v620, 0.01
        %v1066 = vmul.f32 %v622, 0.01
        %v1067 = vmul.f32 %v624, 0.01
        %v1068 = vmul.f32 %v628, 0.01
        %v1069 = vmul.f32 %v630, 0.01
        %v1070 = vmul.f32 %v632, 0.01
        %v1071 = vmul.f32 %v634, 0.01
        %v1072 = vmul.f32 %v638, 0.01
        %v1073 = vmul.f32 %v640, 0.01
        %v1074 = vmul.f32 %v642, 0.01
        %v1075 = vmul.f32 %v644, 0.01
        %v1076 = vmul.f32 %v648, 0.01
        %v1077 = vmul.f32 %v650, 0.01
        %v1078 = vmul.f32 %v652, 0.01
        %v1079 = vmul.f32 %v654, 0.01
        %v1080 = vmul.f32 %v658, 0.01
        %v1081 = vmul.f32 %v660, 0.01
        %v1082 = vmul.f32 %v662, 0.01
        %v1083 = vmul.f32 %v664, 0.01
        %v1084 = vmul.f32 %v668, 0.01
        %v1085 = vmul.f32 %v670, 0.01
        %v1086 = vmul.f32 %v672, 0.01
        %v1087 = vmul.f32 %v674, 0.01
        %v1088 = vmul.f32 %v678, 0.01
        %v1089 = vmul.f32 %v680, 0.01
        %v1090 = vmul.f32 %v682, 0.01
        %v1091 = vmul.f32 %v684, 0.01
        %v1092 = vmul.f32 %v688, 0.01
        %v1093 = vmul.f32 %v690, 0.01
        %v1094 = vmul.f32 %v692, 0.01
        %v1095 = vmul.f32 %v694, 0.01
        %v1096 = vmul.f32 %v698, 0.01
        %v1097 = vmul.f32 %v700, 0.01
        %v1098 = vmul.f32 %v702, 0.01
        %v1099 = vmul.f32 %v704, 0.01
        %v1100 = vmul.f32 %v708, 0.01
        %v1101 = vmul.f32 %v710, 0.01
        %v1102 = vmul.f32 %v712, 0.01
        %v1103 = vmul.f32 %v714, 0.01
        %v1104 = vmul.f32 %v718, 0.01
        %v1105 = vmul.f32 %v720, 0.01
        %v1106 = vmul.f32 %v722, 0.01
        %v1107 = vmul.f32 %v724, 0.01
        %v1108 = vmul.f32 %v728, 0.01
        %v1109 = vmul.f32 %v730, 0.01
        %v1110 = vmul.f32 %v732, 0.01
        %v1111 = vmul.f32 %v734, 0.01
        %v1112 = vmul.f32 %v738, 0.01
        %v1113 = vmul.f32 %v740, 0.01
        %v1114 = vmul.f32 %v742, 0.01
        %v1115 = vmul.f32 %v744, 0.01
        %v1116 = vmul.f32 %v748, 0.01
        %v1117 = vmul.f32 %v750, 0.01
        %v1118 = vmul.f32 %v752, 0.01
        %v1119 = vmul.f32 %v754, 0.01
        %v1120 = vmul.f32 %v758, 0.01
        %v1121 = vmul.f32 %v760, 0.01
        %v1122 = vmul.f32 %v762, 0.01
        %v1123 = vmul.f32 %v764, 0.01
        %v1124 = vmul.f32 %v768, 0.01
        %v1125 = vmul.f32 %v770, 0.01
        %v1126 = vmul.f32 %v772, 0.01
        %v1127 = vmul.f32 %v774, 0.01
        %v1128 = vmul.f32 %v778, 0.01
        %v1129 = vmul.f32 %v780, 0.01
        %v1130 = vmul.f32 %v782, 0.01
        %v1131 = vmul.f32 %v784, 0.01
        %v1132 = vmul.f32 %v788, 0.01
        %v1133 = vmul.f32 %v790, 0.01
        %v1134 = vmul.f32 %v792, 0.01
        %v1135 = vmul.f32 %v794, 0.01
        %v1136 = vmul.f32 %v798, 0.01
        %v1137 = vmul.f32 %v800, 0.01
        %v1138 = vmul.f32 %v802, 0.01
        %v1139 = vmul.f32 %v804, 0.01
        %v1140 = vmul.f32 %v808, 0.01
        %v1141 = vmul.f32 %v810, 0.01
        %v1142 = vmul.f32 %v812, 0.01
        %v1143 = vmul.f32 %v814, 0.01
        %v1144 = vmul.f32 %v818, 0.01
        %v1145 = vmul.f32 %v820, 0.01
        %v1146 = vmul.f32 %v822, 0.01
        %v1147 = vmul.f32 %v824, 0.01
        %v1148 = vmul.f32 %v828, 0.01
        %v1149 = vmul.f32 %v830, 0.01
        %v1150 = vmul.f32 %v832, 0.01
        %v1151 = vmul.f32 %v834, 0.01
        %v1152 = vmul.f32 %v838, 0.01
        %v1153 = vmul.f32 %v840, 0.01
        %v1154 = vmul.f32 %v842, 0.01
        %v1155 = vmul.f32 %v844, 0.01
        %v1156 = vmul.f32 %v848, 0.01
        %v1157 = vmul.f32 %v850, 0.01
        %v1158 = vmul.f32 %v852, 0.01
        %v1159 = vmul.f32 %v854, 0.01
        %v1160 = vmul.f32 %v858, 0.01
        %v1161 = vmul.f32 %v860, 0.01
        %v1162 = vmul.f32 %v862, 0.01
        %v1163 = vmul.f32 %v864, 0.01
        %v1164 = vmul.f32 %v868, 0.01
        %v1165 = vmul.f32 %v870, 0.01
        %v1166 = vmul.f32 %v872, 0.01
        %v1167 = vmul.f32 %v874, 0.01
        %v1168 = vmul.f32 %v878, 0.01
        %v1169 = vmul.f32 %v880, 0.01
        %v1170 = vmul.f32 %v882, 0.01
        %v1171 = vmul.f32 %v884, 0.01
        %v1172 = vmul.f32 %v888, 0.01
        %v1173 = vmul.f32 %v890, 0.01
        %v1174 = vmul.f32 %v892, 0.01
        %v1175 = vmul.f32 %v894, 0.01
        %v1176 = vmul.f32 %v898, 0.01
        %v1177 = vmul.f32 %v900, 0.01
        %v1178 = vmul.f32 %v902, 0.01
        %v1179 = vmul.f32 %v904, 0.01
        %v1180 = vmul.f32 %v908, 0.01
        %v1181 = vmul.f32 %v910, 0.01
        %v1182 = vmul.f32 %v912, 0.01
        %v1183 = vmul.f32 %v914, 0.01
        %v1184 = vmul.f32 %v918, 0.01
        %v1185 = vmul.f32 %v920, 0.01
        %v1186 = vmul.f32 %v922, 0.01
        %v1187 = vmul.f32 %v924, 0.01
        %v1188 = vmul.f32 %v928, 0.01
        %v1189 = vmul.f32 %v930, 0.01
        %v1190 = vmul.f32 %v932, 0.01
        %v1191 = vmul.f32 %v934, 0.01
        %v1192 = vsel %vm936, %v618, %v1064
        %v1193 = vsel %vm937, %v620, %v1065
        %v1194 = vsel %vm938, %v622, %v1066
        %v1195 = vsel %vm939, %v624, %v1067
        %v1196 = vsel %vm940, %v628, %v1068
        %v1197 = vsel %vm941, %v630, %v1069
        %v1198 = vsel %vm942, %v632, %v1070
        %v1199 = vsel %vm943, %v634, %v1071
        %v1200 = vsel %vm944, %v638, %v1072
        %v1201 = vsel %vm945, %v640, %v1073
        %v1202 = vsel %vm946, %v642, %v1074
        %v1203 = vsel %vm947, %v644, %v1075
        %v1204 = vsel %vm948, %v648, %v1076
        %v1205 = vsel %vm949, %v650, %v1077
        %v1206 = vsel %vm950, %v652, %v1078
        %v1207 = vsel %vm951, %v654, %v1079
        %v1208 = vsel %vm952, %v658, %v1080
        %v1209 = vsel %vm953, %v660, %v1081
        %v1210 = vsel %vm954, %v662, %v1082
        %v1211 = vsel %vm955, %v664, %v1083
        %v1212 = vsel %vm956, %v668, %v1084
        %v1213 = vsel %vm957, %v670, %v1085
        %v1214 = vsel %vm958, %v672, %v1086
        %v1215 = vsel %vm959, %v674, %v1087
        %v1216 = vsel %vm960, %v678, %v1088
        %v1217 = vsel %vm961, %v680, %v1089
        %v1218 = vsel %vm962, %v682, %v1090
        %v1219 = vsel %vm963, %v684, %v1091
        %v1220 = vsel %vm964, %v688, %v1092
        %v1221 = vsel %vm965, %v690, %v1093
        %v1222 = vsel %vm966, %v692, %v1094
        %v1223 = vsel %vm967, %v694, %v1095
        %v1224 = vsel %vm968, %v698, %v1096
        %v1225 = vsel %vm969, %v700, %v1097
        %v1226 = vsel %vm970, %v702, %v1098
        %v1227 = vsel %vm971, %v704, %v1099
        %v1228 = vsel %vm972, %v708, %v1100
        %v1229 = vsel %vm973, %v710, %v1101
        %v1230 = vsel %vm974, %v712, %v1102
        %v1231 = vsel %vm975, %v714, %v1103
        %v1232 = vsel %vm976, %v718, %v1104
        %v1233 = vsel %vm977, %v720, %v1105
        %v1234 = vsel %vm978, %v722, %v1106
        %v1235 = vsel %vm979, %v724, %v1107
        %v1236 = vsel %vm980, %v728, %v1108
        %v1237 = vsel %vm981, %v730, %v1109
        %v1238 = vsel %vm982, %v732, %v1110
        %v1239 = vsel %vm983, %v734, %v1111
        %v1240 = vsel %vm984, %v738, %v1112
        %v1241 = vsel %vm985, %v740, %v1113
        %v1242 = vsel %vm986, %v742, %v1114
        %v1243 = vsel %vm987, %v744, %v1115
        %v1244 = vsel %vm988, %v748, %v1116
        %v1245 = vsel %vm989, %v750, %v1117
        %v1246 = vsel %vm990, %v752, %v1118
        %v1247 = vsel %vm991, %v754, %v1119
        %v1248 = vsel %vm992, %v758, %v1120
        %v1249 = vsel %vm993, %v760, %v1121
        %v1250 = vsel %vm994, %v762, %v1122
        %v1251 = vsel %vm995, %v764, %v1123
        %v1252 = vsel %vm996, %v768, %v1124
        %v1253 = vsel %vm997, %v770, %v1125
        %v1254 = vsel %vm998, %v772, %v1126
        %v1255 = vsel %vm999, %v774, %v1127
        %v1256 = vsel %vm1000, %v778, %v1128
        %v1257 = vsel %vm1001, %v780, %v1129
        %v1258 = vsel %vm1002, %v782, %v1130
        %v1259 = vsel %vm1003, %v784, %v1131
        %v1260 = vsel %vm1004, %v788, %v1132
        %v1261 = vsel %vm1005, %v790, %v1133
        %v1262 = vsel %vm1006, %v792, %v1134
        %v1263 = vsel %vm1007, %v794, %v1135
        %v1264 = vsel %vm1008, %v798, %v1136
        %v1265 = vsel %vm1009, %v800, %v1137
        %v1266 = vsel %vm1010, %v802, %v1138
        %v1267 = vsel %vm1011, %v804, %v1139
        %v1268 = vsel %vm1012, %v808, %v1140
        %v1269 = vsel %vm1013, %v810, %v1141
        %v1270 = vsel %vm1014, %v812, %v1142
        %v1271 = vsel %vm1015, %v814, %v1143
        %v1272 = vsel %vm1016, %v818, %v1144
        %v1273 = vsel %vm1017, %v820, %v1145
        %v1274 = vsel %vm1018, %v822, %v1146
        %v1275 = vsel %vm1019, %v824, %v1147
        %v1276 = vsel %vm1020, %v828, %v1148
        %v1277 = vsel %vm1021, %v830, %v1149
        %v1278 = vsel %vm1022, %v832, %v1150
        %v1279 = vsel %vm1023, %v834, %v1151
        %v1280 = vsel %vm1024, %v838, %v1152
        %v1281 = vsel %vm1025, %v840, %v1153
        %v1282 = vsel %vm1026, %v842, %v1154
        %v1283 = vsel %vm1027, %v844, %v1155
        %v1284 = vsel %vm1028, %v848, %v1156
        %v1285 = vsel %vm1029, %v850, %v1157
        %v1286 = vsel %vm1030, %v852, %v1158
        %v1287 = vsel %vm1031, %v854, %v1159
        %v1288 = vsel %vm1032, %v858, %v1160
        %v1289 = vsel %vm1033, %v860, %v1161
        %v1290 = vsel %vm1034, %v862, %v1162
        %v1291 = vsel %vm1035, %v864, %v1163
        %v1292 = vsel %vm1036, %v868, %v1164
        %v1293 = vsel %vm1037, %v870, %v1165
        %v1294 = vsel %vm1038, %v872, %v1166
        %v1295 = vsel %vm1039, %v874, %v1167
        %v1296 = vsel %vm1040, %v878, %v1168
        %v1297 = vsel %vm1041, %v880, %v1169
        %v1298 = vsel %vm1042, %v882, %v1170
        %v1299 = vsel %vm1043, %v884, %v1171
        %v1300 = vsel %vm1044, %v888, %v1172
        %v1301 = vsel %vm1045, %v890, %v1173
        %v1302 = vsel %vm1046, %v892, %v1174
        %v1303 = vsel %vm1047, %v894, %v1175
        %v1304 = vsel %vm1048, %v898, %v1176
        %v1305 = vsel %vm1049, %v900, %v1177
        %v1306 = vsel %vm1050, %v902, %v1178
        %v1307 = vsel %vm1051, %v904, %v1179
        %v1308 = vsel %vm1052, %v908, %v1180
        %v1309 = vsel %vm1053, %v910, %v1181
        %v1310 = vsel %vm1054, %v912, %v1182
        %v1311 = vsel %vm1055, %v914, %v1183
        %v1312 = vsel %vm1056, %v918, %v1184
        %v1313 = vsel %vm1057, %v920, %v1185
        %v1314 = vsel %vm1058, %v922, %v1186
        %v1315 = vsel %vm1059, %v924, %v1187
        %v1316 = vsel %vm1060, %v928, %v1188
        %v1317 = vsel %vm1061, %v930, %v1189
        %v1318 = vsel %vm1062, %v932, %v1190
        %v1319 = vsel %vm1063, %v934, %v1191
        %v1320 = vpack.c.bf16 %v1194, %v1192
        %v1321 = vpack.c.bf16 %v1195, %v1193
        %v1322 = vpack.c.bf16 %v1198, %v1196
        %v1323 = vpack.c.bf16 %v1199, %v1197
        %v1324 = vpack.c.bf16 %v1202, %v1200
        %v1325 = vpack.c.bf16 %v1203, %v1201
        %v1326 = vpack.c.bf16 %v1206, %v1204
        %v1327 = vpack.c.bf16 %v1207, %v1205
        %v1328 = vpack.c.bf16 %v1210, %v1208
        %v1329 = vpack.c.bf16 %v1211, %v1209
        %v1330 = vpack.c.bf16 %v1214, %v1212
        %v1331 = vpack.c.bf16 %v1215, %v1213
        %v1332 = vpack.c.bf16 %v1218, %v1216
        %v1333 = vpack.c.bf16 %v1219, %v1217
        %v1334 = vpack.c.bf16 %v1222, %v1220
        %v1335 = vpack.c.bf16 %v1223, %v1221
        %v1336 = vpack.c.bf16 %v1226, %v1224
        %v1337 = vpack.c.bf16 %v1227, %v1225
        %v1338 = vpack.c.bf16 %v1230, %v1228
        %v1339 = vpack.c.bf16 %v1231, %v1229
        %v1340 = vpack.c.bf16 %v1234, %v1232
        %v1341 = vpack.c.bf16 %v1235, %v1233
        %v1342 = vpack.c.bf16 %v1238, %v1236
        %v1343 = vpack.c.bf16 %v1239, %v1237
        %v1344 = vpack.c.bf16 %v1242, %v1240
        %v1345 = vpack.c.bf16 %v1243, %v1241
        %v1346 = vpack.c.bf16 %v1246, %v1244
        %v1347 = vpack.c.bf16 %v1247, %v1245
        %v1348 = vpack.c.bf16 %v1250, %v1248
        %v1349 = vpack.c.bf16 %v1251, %v1249
        %v1350 = vpack.c.bf16 %v1254, %v1252
        %v1351 = vpack.c.bf16 %v1255, %v1253
        %v1352 = vpack.c.bf16 %v1258, %v1256
        %v1353 = vpack.c.bf16 %v1259, %v1257
        %v1354 = vpack.c.bf16 %v1262, %v1260
        %v1355 = vpack.c.bf16 %v1263, %v1261
        %v1356 = vpack.c.bf16 %v1266, %v1264
        %v1357 = vpack.c.bf16 %v1267, %v1265
        %v1358 = vpack.c.bf16 %v1270, %v1268
        %v1359 = vpack.c.bf16 %v1271, %v1269
        %v1360 = vpack.c.bf16 %v1274, %v1272
        %v1361 = vpack.c.bf16 %v1275, %v1273
        %v1362 = vpack.c.bf16 %v1278, %v1276
        %v1363 = vpack.c.bf16 %v1279, %v1277
        %v1364 = vpack.c.bf16 %v1282, %v1280
        %v1365 = vpack.c.bf16 %v1283, %v1281
        %v1366 = vpack.c.bf16 %v1286, %v1284
        %v1367 = vpack.c.bf16 %v1287, %v1285
        %v1368 = vpack.c.bf16 %v1290, %v1288
        %v1369 = vpack.c.bf16 %v1291, %v1289
        %v1370 = vpack.c.bf16 %v1294, %v1292
        %v1371 = vpack.c.bf16 %v1295, %v1293
        %v1372 = vpack.c.bf16 %v1298, %v1296
        %v1373 = vpack.c.bf16 %v1299, %v1297
        %v1374 = vpack.c.bf16 %v1302, %v1300
        %v1375 = vpack.c.bf16 %v1303, %v1301
        %v1376 = vpack.c.bf16 %v1306, %v1304
        %v1377 = vpack.c.bf16 %v1307, %v1305
        %v1378 = vpack.c.bf16 %v1310, %v1308
        %v1379 = vpack.c.bf16 %v1311, %v1309
        %v1380 = vpack.c.bf16 %v1314, %v1312
        %v1381 = vpack.c.bf16 %v1315, %v1313
        %v1382 = vpack.c.bf16 %v1318, %v1316
        %v1383 = vpack.c.bf16 %v1319, %v1317
        %v1384 = vld [vmem:[#allocation8] sm:$0xf]
        %v1385 = vld [vmem:[#allocation8 + $0x4] sm:$0xf]
        %v1386 = vld [vmem:[#allocation8 + $0x8] sm:$0xf]
        %v1387 = vld [vmem:[#allocation8 + $0xc] sm:$0xf]
        %v1388 = vld [vmem:[#allocation8 + $0x10] sm:$0xf]
        %v1389 = vld [vmem:[#allocation8 + $0x14] sm:$0xf]
        %v1390 = vld [vmem:[#allocation8 + $0x18] sm:$0xf]
        %v1391 = vld [vmem:[#allocation8 + $0x1c] sm:$0xf]
        %v1392 = vld [vmem:[#allocation8 + $0x20] sm:$0xf]
        %v1393 = vld [vmem:[#allocation8 + $0x24] sm:$0xf]
        %v1394 = vld [vmem:[#allocation8 + $0x28] sm:$0xf]
        %v1395 = vld [vmem:[#allocation8 + $0x2c] sm:$0xf]
        %v1396 = vld [vmem:[#allocation8 + $0x30] sm:$0xf]
        %v1397 = vld [vmem:[#allocation8 + $0x34] sm:$0xf]
        %v1398 = vld [vmem:[#allocation8 + $0x38] sm:$0xf]
        %v1399 = vld [vmem:[#allocation8 + $0x3c] sm:$0xf]
        %v1400 = vld [vmem:[#allocation8 + $0x40] sm:$0xf]
        %v1401 = vld [vmem:[#allocation8 + $0x44] sm:$0xf]
        %v1402 = vld [vmem:[#allocation8 + $0x48] sm:$0xf]
        %v1403 = vld [vmem:[#allocation8 + $0x4c] sm:$0xf]
        %v1404 = vld [vmem:[#allocation8 + $0x50] sm:$0xf]
        %v1405 = vld [vmem:[#allocation8 + $0x54] sm:$0xf]
        %v1406 = vld [vmem:[#allocation8 + $0x58] sm:$0xf]
        %v1407 = vld [vmem:[#allocation8 + $0x5c] sm:$0xf]
        %v1408 = vld [vmem:[#allocation8 + $0x60] sm:$0xf]
        %v1409 = vld [vmem:[#allocation8 + $0x64] sm:$0xf]
        %v1410 = vld [vmem:[#allocation8 + $0x68] sm:$0xf]
        %v1411 = vld [vmem:[#allocation8 + $0x6c] sm:$0xf]
        %v1412 = vld [vmem:[#allocation8 + $0x70] sm:$0xf]
        %v1413 = vld [vmem:[#allocation8 + $0x74] sm:$0xf]
        %v1414 = vld [vmem:[#allocation8 + $0x78] sm:$0xf]
        %v1415 = vld [vmem:[#allocation8 + $0x7c] sm:$0xf]
        %v1416 = vld [vmem:[%s5] sm:$0x1]
        %v1418 = vlaneseq
        %v1419 = vshrl.u32 %v1418, 7
        %v1420 = vsub.s32 0, %v1419
        %v1421 = vrot.slane %v1416, %v1420
        %v1455 = vunpack.c.l.b16 %v1384
        %v1456 = vunpack.c.l.b16 %v1385
        %v1457 = vunpack.c.l.b16 %v1386
        %v1458 = vunpack.c.l.b16 %v1387
        %v1459 = vunpack.c.l.b16 %v1388
        %v1460 = vunpack.c.l.b16 %v1389
        %v1461 = vunpack.c.l.b16 %v1390
        %v1462 = vunpack.c.l.b16 %v1391
        %v1463 = vunpack.c.l.b16 %v1392
        %v1464 = vunpack.c.l.b16 %v1393
        %v1465 = vunpack.c.l.b16 %v1394
        %v1466 = vunpack.c.l.b16 %v1395
        %v1467 = vunpack.c.l.b16 %v1396
        %v1468 = vunpack.c.l.b16 %v1397
        %v1469 = vunpack.c.l.b16 %v1398
        %v1470 = vunpack.c.l.b16 %v1399
        %v1471 = vunpack.c.l.b16 %v1400
        %v1472 = vunpack.c.l.b16 %v1401
        %v1473 = vunpack.c.l.b16 %v1402
        %v1474 = vunpack.c.l.b16 %v1403
        %v1475 = vunpack.c.l.b16 %v1404
        %v1476 = vunpack.c.l.b16 %v1405
        %v1477 = vunpack.c.l.b16 %v1406
        %v1478 = vunpack.c.l.b16 %v1407
        %v1479 = vunpack.c.l.b16 %v1408
        %v1480 = vunpack.c.l.b16 %v1409
        %v1481 = vunpack.c.l.b16 %v1410
        %v1482 = vunpack.c.l.b16 %v1411
        %v1483 = vunpack.c.l.b16 %v1412
        %v1484 = vunpack.c.l.b16 %v1413
        %v1485 = vunpack.c.l.b16 %v1414
        %v1486 = vunpack.c.l.b16 %v1415
        %v1487 = vpack.c.b16 %v1456, %v1455
        %v1488 = vpack.c.b16 %v1458, %v1457
        %v1489 = vpack.c.b16 %v1460, %v1459
        %v1490 = vpack.c.b16 %v1462, %v1461
        %v1491 = vpack.c.b16 %v1464, %v1463
        %v1492 = vpack.c.b16 %v1466, %v1465
        %v1493 = vpack.c.b16 %v1468, %v1467
        %v1494 = vpack.c.b16 %v1470, %v1469
        %v1495 = vpack.c.b16 %v1472, %v1471
        %v1496 = vpack.c.b16 %v1474, %v1473
        %v1497 = vpack.c.b16 %v1476, %v1475
        %v1498 = vpack.c.b16 %v1478, %v1477
        %v1499 = vpack.c.b16 %v1480, %v1479
        %v1500 = vpack.c.b16 %v1482, %v1481
        %v1501 = vpack.c.b16 %v1484, %v1483
        %v1502 = vpack.c.b16 %v1486, %v1485
        %1519 = vmatprep.subr.bf16.mxu0 0
        %1520 = vmatpush1.bf16.msra.mxu0 %v1494
        %1521 = vmatprep.subr.bf16.mxu0 0
        %1522 = vmatpush1.bf16.msra.mxu0 %v1493
        %1523 = vmatprep.subr.bf16.mxu0 0
        %1524 = vmatpush1.bf16.msra.mxu0 %v1492
        %1525 = vmatprep.subr.bf16.mxu0 0
        %1526 = vmatpush1.bf16.msra.mxu0 %v1491
        %1527 = vmatprep.subr.bf16.mxu0 0
        %1528 = vmatpush1.bf16.msra.mxu0 %v1490
        %1529 = vmatprep.subr.bf16.mxu0 0
        %1530 = vmatpush1.bf16.msra.mxu0 %v1489
        %1531 = vmatprep.subr.bf16.mxu0 0
        %1532 = vmatpush1.bf16.msra.mxu0 %v1488
        %1533 = vmatprep.subr.bf16.mxu0 0
        %1534 = vmatpush1.bf16.msra.mxu0 %v1487
        %1535 = vmatprep.subr.bf16.mxu0 0
        %1536 = vmatpush2.bf16.msra.mxu0 %v1502
        %1537 = vmatprep.subr.bf16.mxu0 0
        %1538 = vmatpush2.bf16.msra.mxu0 %v1501
        %1539 = vmatprep.subr.bf16.mxu0 0
        %1540 = vmatpush2.bf16.msra.mxu0 %v1500
        %1541 = vmatprep.subr.bf16.mxu0 0
        %1542 = vmatpush2.bf16.msra.mxu0 %v1499
        %1543 = vmatprep.subr.bf16.mxu0 0
        %1544 = vmatpush2.bf16.msra.mxu0 %v1498
        %1545 = vmatprep.subr.bf16.mxu0 0
        %1546 = vmatpush2.bf16.msra.mxu0 %v1497
        %1547 = vmatprep.subr.bf16.mxu0 0
        %1548 = vmatpush2.bf16.msra.mxu0 %v1496
        %1549 = vmatprep.subr.bf16.mxu0 0
        %1550 = vmatpush2.bf16.msra.mxu0 %v1495
        %1551 = vmatprep.mubr.bf16.mxu0 %v1321
        %1552 = vmatmul.mubr.bf16.gmra.mxu0 %v1320
        %v1553 = vpop.f32.mrf.mxu0
        %v1554 = vadd.f32 %v1421, %v1553
        %v1555 = vpop.f32.mrf.mxu0
        %v1556 = vpop.f32.mrf.mxu0
        %v1557 = vadd.f32 %v1421, %v1556
        %v1558 = vpop.f32.mrf.mxu0
        %1559 = vmatprep.mubr.bf16.mxu0 %v1323
        %1560 = vmatmul.mubr.bf16.gmra.mxu0 %v1322
        %v1561 = vpop.f32.mrf.mxu0
        %v1562 = vadd.f32 %v1421, %v1561
        %v1563 = vpop.f32.mrf.mxu0
        %v1564 = vpop.f32.mrf.mxu0
        %v1565 = vadd.f32 %v1421, %v1564
        %v1566 = vpop.f32.mrf.mxu0
        %1567 = vmatprep.mubr.bf16.mxu0 %v1325
        %1568 = vmatmul.mubr.bf16.gmra.mxu0 %v1324
        %v1569 = vpop.f32.mrf.mxu0
        %v1570 = vadd.f32 %v1421, %v1569
        %v1571 = vpop.f32.mrf.mxu0
        %v1572 = vpop.f32.mrf.mxu0
        %v1573 = vadd.f32 %v1421, %v1572
        %v1574 = vpop.f32.mrf.mxu0
        %1575 = vmatprep.mubr.bf16.mxu0 %v1327
        %1576 = vmatmul.mubr.bf16.gmra.mxu0 %v1326
        %v1577 = vpop.f32.mrf.mxu0
        %v1578 = vadd.f32 %v1421, %v1577
        %v1579 = vpop.f32.mrf.mxu0
        %v1580 = vpop.f32.mrf.mxu0
        %v1581 = vadd.f32 %v1421, %v1580
        %v1582 = vpop.f32.mrf.mxu0
        %1583 = vmatprep.mubr.bf16.mxu0 %v1329
        %1584 = vmatmul.mubr.bf16.gmra.mxu0 %v1328
        %v1585 = vpop.f32.mrf.mxu0
        %v1586 = vadd.f32 %v1421, %v1585
        %v1587 = vpop.f32.mrf.mxu0
        %v1588 = vpop.f32.mrf.mxu0
        %v1589 = vadd.f32 %v1421, %v1588
        %v1590 = vpop.f32.mrf.mxu0
        %1591 = vmatprep.mubr.bf16.mxu0 %v1331
        %1592 = vmatmul.mubr.bf16.gmra.mxu0 %v1330
        %v1593 = vpop.f32.mrf.mxu0
        %v1594 = vadd.f32 %v1421, %v1593
        %v1595 = vpop.f32.mrf.mxu0
        %v1596 = vpop.f32.mrf.mxu0
        %v1597 = vadd.f32 %v1421, %v1596
        %v1598 = vpop.f32.mrf.mxu0
        %1599 = vmatprep.mubr.bf16.mxu0 %v1333
        %1600 = vmatmul.mubr.bf16.gmra.mxu0 %v1332
        %v1601 = vpop.f32.mrf.mxu0
        %v1602 = vadd.f32 %v1421, %v1601
        %v1603 = vpop.f32.mrf.mxu0
        %v1604 = vpop.f32.mrf.mxu0
        %v1605 = vadd.f32 %v1421, %v1604
        %v1606 = vpop.f32.mrf.mxu0
        %1607 = vmatprep.mubr.bf16.mxu0 %v1335
        %1608 = vmatmul.mubr.bf16.gmra.mxu0 %v1334
        %v1609 = vpop.f32.mrf.mxu0
        %v1610 = vadd.f32 %v1421, %v1609
        %v1611 = vpop.f32.mrf.mxu0
        %v1612 = vpop.f32.mrf.mxu0
        %v1613 = vadd.f32 %v1421, %v1612
        %v1614 = vpop.f32.mrf.mxu0
        %1615 = vmatprep.mubr.bf16.mxu0 %v1337
        %1616 = vmatmul.mubr.bf16.gmra.mxu0 %v1336
        %v1617 = vpop.f32.mrf.mxu0
        %v1618 = vadd.f32 %v1421, %v1617
        %v1619 = vpop.f32.mrf.mxu0
        %v1620 = vpop.f32.mrf.mxu0
        %v1621 = vadd.f32 %v1421, %v1620
        %v1622 = vpop.f32.mrf.mxu0
        %1623 = vmatprep.mubr.bf16.mxu0 %v1339
        %1624 = vmatmul.mubr.bf16.gmra.mxu0 %v1338
        %v1625 = vpop.f32.mrf.mxu0
        %v1626 = vadd.f32 %v1421, %v1625
        %v1627 = vpop.f32.mrf.mxu0
        %v1628 = vpop.f32.mrf.mxu0
        %v1629 = vadd.f32 %v1421, %v1628
        %v1630 = vpop.f32.mrf.mxu0
        %1631 = vmatprep.mubr.bf16.mxu0 %v1341
        %1632 = vmatmul.mubr.bf16.gmra.mxu0 %v1340
        %v1633 = vpop.f32.mrf.mxu0
        %v1634 = vadd.f32 %v1421, %v1633
        %v1635 = vpop.f32.mrf.mxu0
        %v1636 = vpop.f32.mrf.mxu0
        %v1637 = vadd.f32 %v1421, %v1636
        %v1638 = vpop.f32.mrf.mxu0
        %1639 = vmatprep.mubr.bf16.mxu0 %v1343
        %1640 = vmatmul.mubr.bf16.gmra.mxu0 %v1342
        %v1641 = vpop.f32.mrf.mxu0
        %v1642 = vadd.f32 %v1421, %v1641
        %v1643 = vpop.f32.mrf.mxu0
        %v1644 = vpop.f32.mrf.mxu0
        %v1645 = vadd.f32 %v1421, %v1644
        %v1646 = vpop.f32.mrf.mxu0
        %1647 = vmatprep.mubr.bf16.mxu0 %v1345
        %1648 = vmatmul.mubr.bf16.gmra.mxu0 %v1344
        %v1649 = vpop.f32.mrf.mxu0
        %v1650 = vadd.f32 %v1421, %v1649
        %v1651 = vpop.f32.mrf.mxu0
        %v1652 = vpop.f32.mrf.mxu0
        %v1653 = vadd.f32 %v1421, %v1652
        %v1654 = vpop.f32.mrf.mxu0
        %1655 = vmatprep.mubr.bf16.mxu0 %v1347
        %1656 = vmatmul.mubr.bf16.gmra.mxu0 %v1346
        %v1657 = vpop.f32.mrf.mxu0
        %v1658 = vadd.f32 %v1421, %v1657
        %v1659 = vpop.f32.mrf.mxu0
        %v1660 = vpop.f32.mrf.mxu0
        %v1661 = vadd.f32 %v1421, %v1660
        %v1662 = vpop.f32.mrf.mxu0
        %1663 = vmatprep.mubr.bf16.mxu0 %v1349
        %1664 = vmatmul.mubr.bf16.gmra.mxu0 %v1348
        %v1665 = vpop.f32.mrf.mxu0
        %v1666 = vadd.f32 %v1421, %v1665
        %v1667 = vpop.f32.mrf.mxu0
        %v1668 = vpop.f32.mrf.mxu0
        %v1669 = vadd.f32 %v1421, %v1668
        %v1670 = vpop.f32.mrf.mxu0
        %1671 = vmatprep.mubr.bf16.mxu0 %v1351
        %1672 = vmatmul.mubr.bf16.gmra.mxu0 %v1350
        %v1673 = vpop.f32.mrf.mxu0
        %v1674 = vadd.f32 %v1421, %v1673
        %v1675 = vpop.f32.mrf.mxu0
        %v1676 = vpop.f32.mrf.mxu0
        %v1677 = vadd.f32 %v1421, %v1676
        %v1678 = vpop.f32.mrf.mxu0
        %1679 = vmatprep.mubr.bf16.mxu0 %v1353
        %1680 = vmatmul.mubr.bf16.gmra.mxu0 %v1352
        %v1681 = vpop.f32.mrf.mxu0
        %v1682 = vadd.f32 %v1421, %v1681
        %v1683 = vpop.f32.mrf.mxu0
        %v1684 = vpop.f32.mrf.mxu0
        %v1685 = vadd.f32 %v1421, %v1684
        %v1686 = vpop.f32.mrf.mxu0
        %1687 = vmatprep.mubr.bf16.mxu0 %v1355
        %1688 = vmatmul.mubr.bf16.gmra.mxu0 %v1354
        %v1689 = vpop.f32.mrf.mxu0
        %v1690 = vadd.f32 %v1421, %v1689
        %v1691 = vpop.f32.mrf.mxu0
        %v1692 = vpop.f32.mrf.mxu0
        %v1693 = vadd.f32 %v1421, %v1692
        %v1694 = vpop.f32.mrf.mxu0
        %1695 = vmatprep.mubr.bf16.mxu0 %v1357
        %1696 = vmatmul.mubr.bf16.gmra.mxu0 %v1356
        %v1697 = vpop.f32.mrf.mxu0
        %v1698 = vadd.f32 %v1421, %v1697
        %v1699 = vpop.f32.mrf.mxu0
        %v1700 = vpop.f32.mrf.mxu0
        %v1701 = vadd.f32 %v1421, %v1700
        %v1702 = vpop.f32.mrf.mxu0
        %1703 = vmatprep.mubr.bf16.mxu0 %v1359
        %1704 = vmatmul.mubr.bf16.gmra.mxu0 %v1358
        %v1705 = vpop.f32.mrf.mxu0
        %v1706 = vadd.f32 %v1421, %v1705
        %v1707 = vpop.f32.mrf.mxu0
        %v1708 = vpop.f32.mrf.mxu0
        %v1709 = vadd.f32 %v1421, %v1708
        %v1710 = vpop.f32.mrf.mxu0
        %1711 = vmatprep.mubr.bf16.mxu0 %v1361
        %1712 = vmatmul.mubr.bf16.gmra.mxu0 %v1360
        %v1713 = vpop.f32.mrf.mxu0
        %v1714 = vadd.f32 %v1421, %v1713
        %v1715 = vpop.f32.mrf.mxu0
        %v1716 = vpop.f32.mrf.mxu0
        %v1717 = vadd.f32 %v1421, %v1716
        %v1718 = vpop.f32.mrf.mxu0
        %1719 = vmatprep.mubr.bf16.mxu0 %v1363
        %1720 = vmatmul.mubr.bf16.gmra.mxu0 %v1362
        %v1721 = vpop.f32.mrf.mxu0
        %v1722 = vadd.f32 %v1421, %v1721
        %v1723 = vpop.f32.mrf.mxu0
        %v1724 = vpop.f32.mrf.mxu0
        %v1725 = vadd.f32 %v1421, %v1724
        %v1726 = vpop.f32.mrf.mxu0
        %1727 = vmatprep.mubr.bf16.mxu0 %v1365
        %1728 = vmatmul.mubr.bf16.gmra.mxu0 %v1364
        %v1729 = vpop.f32.mrf.mxu0
        %v1730 = vadd.f32 %v1421, %v1729
        %v1731 = vpop.f32.mrf.mxu0
        %v1732 = vpop.f32.mrf.mxu0
        %v1733 = vadd.f32 %v1421, %v1732
        %v1734 = vpop.f32.mrf.mxu0
        %1735 = vmatprep.mubr.bf16.mxu0 %v1367
        %1736 = vmatmul.mubr.bf16.gmra.mxu0 %v1366
        %v1737 = vpop.f32.mrf.mxu0
        %v1738 = vadd.f32 %v1421, %v1737
        %v1739 = vpop.f32.mrf.mxu0
        %v1740 = vpop.f32.mrf.mxu0
        %v1741 = vadd.f32 %v1421, %v1740
        %v1742 = vpop.f32.mrf.mxu0
        %1743 = vmatprep.mubr.bf16.mxu0 %v1369
        %1744 = vmatmul.mubr.bf16.gmra.mxu0 %v1368
        %v1745 = vpop.f32.mrf.mxu0
        %v1746 = vadd.f32 %v1421, %v1745
        %v1747 = vpop.f32.mrf.mxu0
        %v1748 = vpop.f32.mrf.mxu0
        %v1749 = vadd.f32 %v1421, %v1748
        %v1750 = vpop.f32.mrf.mxu0
        %1751 = vmatprep.mubr.bf16.mxu0 %v1371
        %1752 = vmatmul.mubr.bf16.gmra.mxu0 %v1370
        %v1753 = vpop.f32.mrf.mxu0
        %v1754 = vadd.f32 %v1421, %v1753
        %v1755 = vpop.f32.mrf.mxu0
        %v1756 = vpop.f32.mrf.mxu0
        %v1757 = vadd.f32 %v1421, %v1756
        %v1758 = vpop.f32.mrf.mxu0
        %1759 = vmatprep.mubr.bf16.mxu0 %v1373
        %1760 = vmatmul.mubr.bf16.gmra.mxu0 %v1372
        %v1761 = vpop.f32.mrf.mxu0
        %v1762 = vadd.f32 %v1421, %v1761
        %v1763 = vpop.f32.mrf.mxu0
        %v1764 = vpop.f32.mrf.mxu0
        %v1765 = vadd.f32 %v1421, %v1764
        %v1766 = vpop.f32.mrf.mxu0
        %1767 = vmatprep.mubr.bf16.mxu0 %v1375
        %1768 = vmatmul.mubr.bf16.gmra.mxu0 %v1374
        %v1769 = vpop.f32.mrf.mxu0
        %v1770 = vadd.f32 %v1421, %v1769
        %v1771 = vpop.f32.mrf.mxu0
        %v1772 = vpop.f32.mrf.mxu0
        %v1773 = vadd.f32 %v1421, %v1772
        %v1774 = vpop.f32.mrf.mxu0
        %1775 = vmatprep.mubr.bf16.mxu0 %v1377
        %1776 = vmatmul.mubr.bf16.gmra.mxu0 %v1376
        %v1777 = vpop.f32.mrf.mxu0
        %v1778 = vadd.f32 %v1421, %v1777
        %v1779 = vpop.f32.mrf.mxu0
        %v1780 = vpop.f32.mrf.mxu0
        %v1781 = vadd.f32 %v1421, %v1780
        %v1782 = vpop.f32.mrf.mxu0
        %1783 = vmatprep.mubr.bf16.mxu0 %v1379
        %1784 = vmatmul.mubr.bf16.gmra.mxu0 %v1378
        %v1785 = vpop.f32.mrf.mxu0
        %v1786 = vadd.f32 %v1421, %v1785
        %v1787 = vpop.f32.mrf.mxu0
        %v1788 = vpop.f32.mrf.mxu0
        %v1789 = vadd.f32 %v1421, %v1788
        %v1790 = vpop.f32.mrf.mxu0
        %1791 = vmatprep.mubr.bf16.mxu0 %v1381
        %1792 = vmatmul.mubr.bf16.gmra.mxu0 %v1380
        %v1793 = vpop.f32.mrf.mxu0
        %v1794 = vadd.f32 %v1421, %v1793
        %v1795 = vpop.f32.mrf.mxu0
        %v1796 = vpop.f32.mrf.mxu0
        %v1797 = vadd.f32 %v1421, %v1796
        %v1798 = vpop.f32.mrf.mxu0
        %1799 = vmatprep.mubr.bf16.mxu0 %v1383
        %1800 = vmatmul.mubr.bf16.gmra.mxu0 %v1382
        %v1801 = vpop.f32.mrf.mxu0
        %v1802 = vadd.f32 %v1421, %v1801
        %v1803 = vpop.f32.mrf.mxu0
        %v1804 = vpop.f32.mrf.mxu0
        %v1805 = vadd.f32 %v1421, %v1804
        %v1806 = vpop.f32.mrf.mxu0
        %1807 = vdwg.mxu0
        %vm1808 = vcmp.gt.f32.partialorder %v1554, 0.0
        %vm1809 = vcmp.gt.f32.partialorder %v1557, 0.0
        %vm1810 = vcmp.gt.f32.partialorder %v1562, 0.0
        %vm1811 = vcmp.gt.f32.partialorder %v1565, 0.0
        %vm1812 = vcmp.gt.f32.partialorder %v1570, 0.0
        %vm1813 = vcmp.gt.f32.partialorder %v1573, 0.0
        %vm1814 = vcmp.gt.f32.partialorder %v1578, 0.0
        %vm1815 = vcmp.gt.f32.partialorder %v1581, 0.0
        %vm1816 = vcmp.gt.f32.partialorder %v1586, 0.0
        %vm1817 = vcmp.gt.f32.partialorder %v1589, 0.0
        %vm1818 = vcmp.gt.f32.partialorder %v1594, 0.0
        %vm1819 = vcmp.gt.f32.partialorder %v1597, 0.0
        %vm1820 = vcmp.gt.f32.partialorder %v1602, 0.0
        %vm1821 = vcmp.gt.f32.partialorder %v1605, 0.0
        %vm1822 = vcmp.gt.f32.partialorder %v1610, 0.0
        %vm1823 = vcmp.gt.f32.partialorder %v1613, 0.0
        %vm1824 = vcmp.gt.f32.partialorder %v1618, 0.0
        %vm1825 = vcmp.gt.f32.partialorder %v1621, 0.0
        %vm1826 = vcmp.gt.f32.partialorder %v1626, 0.0
        %vm1827 = vcmp.gt.f32.partialorder %v1629, 0.0
        %vm1828 = vcmp.gt.f32.partialorder %v1634, 0.0
        %vm1829 = vcmp.gt.f32.partialorder %v1637, 0.0
        %vm1830 = vcmp.gt.f32.partialorder %v1642, 0.0
        %vm1831 = vcmp.gt.f32.partialorder %v1645, 0.0
        %vm1832 = vcmp.gt.f32.partialorder %v1650, 0.0
        %vm1833 = vcmp.gt.f32.partialorder %v1653, 0.0
        %vm1834 = vcmp.gt.f32.partialorder %v1658, 0.0
        %vm1835 = vcmp.gt.f32.partialorder %v1661, 0.0
        %vm1836 = vcmp.gt.f32.partialorder %v1666, 0.0
        %vm1837 = vcmp.gt.f32.partialorder %v1669, 0.0
        %vm1838 = vcmp.gt.f32.partialorder %v1674, 0.0
        %vm1839 = vcmp.gt.f32.partialorder %v1677, 0.0
        %vm1840 = vcmp.gt.f32.partialorder %v1682, 0.0
        %vm1841 = vcmp.gt.f32.partialorder %v1685, 0.0
        %vm1842 = vcmp.gt.f32.partialorder %v1690, 0.0
        %vm1843 = vcmp.gt.f32.partialorder %v1693, 0.0
        %vm1844 = vcmp.gt.f32.partialorder %v1698, 0.0
        %vm1845 = vcmp.gt.f32.partialorder %v1701, 0.0
        %vm1846 = vcmp.gt.f32.partialorder %v1706, 0.0
        %vm1847 = vcmp.gt.f32.partialorder %v1709, 0.0
        %vm1848 = vcmp.gt.f32.partialorder %v1714, 0.0
        %vm1849 = vcmp.gt.f32.partialorder %v1717, 0.0
        %vm1850 = vcmp.gt.f32.partialorder %v1722, 0.0
        %vm1851 = vcmp.gt.f32.partialorder %v1725, 0.0
        %vm1852 = vcmp.gt.f32.partialorder %v1730, 0.0
        %vm1853 = vcmp.gt.f32.partialorder %v1733, 0.0
        %vm1854 = vcmp.gt.f32.partialorder %v1738, 0.0
        %vm1855 = vcmp.gt.f32.partialorder %v1741, 0.0
        %vm1856 = vcmp.gt.f32.partialorder %v1746, 0.0
        %vm1857 = vcmp.gt.f32.partialorder %v1749, 0.0
        %vm1858 = vcmp.gt.f32.partialorder %v1754, 0.0
        %vm1859 = vcmp.gt.f32.partialorder %v1757, 0.0
        %vm1860 = vcmp.gt.f32.partialorder %v1762, 0.0
        %vm1861 = vcmp.gt.f32.partialorder %v1765, 0.0
        %vm1862 = vcmp.gt.f32.partialorder %v1770, 0.0
        %vm1863 = vcmp.gt.f32.partialorder %v1773, 0.0
        %vm1864 = vcmp.gt.f32.partialorder %v1778, 0.0
        %vm1865 = vcmp.gt.f32.partialorder %v1781, 0.0
        %vm1866 = vcmp.gt.f32.partialorder %v1786, 0.0
        %vm1867 = vcmp.gt.f32.partialorder %v1789, 0.0
        %vm1868 = vcmp.gt.f32.partialorder %v1794, 0.0
        %vm1869 = vcmp.gt.f32.partialorder %v1797, 0.0
        %vm1870 = vcmp.gt.f32.partialorder %v1802, 0.0
        %vm1871 = vcmp.gt.f32.partialorder %v1805, 0.0
        %v1872 = vmul.f32 %v1554, 0.01
        %v1873 = vmul.f32 %v1557, 0.01
        %v1874 = vmul.f32 %v1562, 0.01
        %v1875 = vmul.f32 %v1565, 0.01
        %v1876 = vmul.f32 %v1570, 0.01
        %v1877 = vmul.f32 %v1573, 0.01
        %v1878 = vmul.f32 %v1578, 0.01
        %v1879 = vmul.f32 %v1581, 0.01
        %v1880 = vmul.f32 %v1586, 0.01
        %v1881 = vmul.f32 %v1589, 0.01
        %v1882 = vmul.f32 %v1594, 0.01
        %v1883 = vmul.f32 %v1597, 0.01
        %v1884 = vmul.f32 %v1602, 0.01
        %v1885 = vmul.f32 %v1605, 0.01
        %v1886 = vmul.f32 %v1610, 0.01
        %v1887 = vmul.f32 %v1613, 0.01
        %v1888 = vmul.f32 %v1618, 0.01
        %v1889 = vmul.f32 %v1621, 0.01
        %v1890 = vmul.f32 %v1626, 0.01
        %v1891 = vmul.f32 %v1629, 0.01
        %v1892 = vmul.f32 %v1634, 0.01
        %v1893 = vmul.f32 %v1637, 0.01
        %v1894 = vmul.f32 %v1642, 0.01
        %v1895 = vmul.f32 %v1645, 0.01
        %v1896 = vmul.f32 %v1650, 0.01
        %v1897 = vmul.f32 %v1653, 0.01
        %v1898 = vmul.f32 %v1658, 0.01
        %v1899 = vmul.f32 %v1661, 0.01
        %v1900 = vmul.f32 %v1666, 0.01
        %v1901 = vmul.f32 %v1669, 0.01
        %v1902 = vmul.f32 %v1674, 0.01
        %v1903 = vmul.f32 %v1677, 0.01
        %v1904 = vmul.f32 %v1682, 0.01
        %v1905 = vmul.f32 %v1685, 0.01
        %v1906 = vmul.f32 %v1690, 0.01
        %v1907 = vmul.f32 %v1693, 0.01
        %v1908 = vmul.f32 %v1698, 0.01
        %v1909 = vmul.f32 %v1701, 0.01
        %v1910 = vmul.f32 %v1706, 0.01
        %v1911 = vmul.f32 %v1709, 0.01
        %v1912 = vmul.f32 %v1714, 0.01
        %v1913 = vmul.f32 %v1717, 0.01
        %v1914 = vmul.f32 %v1722, 0.01
        %v1915 = vmul.f32 %v1725, 0.01
        %v1916 = vmul.f32 %v1730, 0.01
        %v1917 = vmul.f32 %v1733, 0.01
        %v1918 = vmul.f32 %v1738, 0.01
        %v1919 = vmul.f32 %v1741, 0.01
        %v1920 = vmul.f32 %v1746, 0.01
        %v1921 = vmul.f32 %v1749, 0.01
        %v1922 = vmul.f32 %v1754, 0.01
        %v1923 = vmul.f32 %v1757, 0.01
        %v1924 = vmul.f32 %v1762, 0.01
        %v1925 = vmul.f32 %v1765, 0.01
        %v1926 = vmul.f32 %v1770, 0.01
        %v1927 = vmul.f32 %v1773, 0.01
        %v1928 = vmul.f32 %v1778, 0.01
        %v1929 = vmul.f32 %v1781, 0.01
        %v1930 = vmul.f32 %v1786, 0.01
        %v1931 = vmul.f32 %v1789, 0.01
        %v1932 = vmul.f32 %v1794, 0.01
        %v1933 = vmul.f32 %v1797, 0.01
        %v1934 = vmul.f32 %v1802, 0.01
        %v1935 = vmul.f32 %v1805, 0.01
        %v1936 = vsel %vm1808, %v1554, %v1872
        %v1937 = vsel %vm1809, %v1557, %v1873
        %v1938 = vsel %vm1810, %v1562, %v1874
        %v1939 = vsel %vm1811, %v1565, %v1875
        %v1940 = vsel %vm1812, %v1570, %v1876
        %v1941 = vsel %vm1813, %v1573, %v1877
        %v1942 = vsel %vm1814, %v1578, %v1878
        %v1943 = vsel %vm1815, %v1581, %v1879
        %v1944 = vsel %vm1816, %v1586, %v1880
        %v1945 = vsel %vm1817, %v1589, %v1881
        %v1946 = vsel %vm1818, %v1594, %v1882
        %v1947 = vsel %vm1819, %v1597, %v1883
        %v1948 = vsel %vm1820, %v1602, %v1884
        %v1949 = vsel %vm1821, %v1605, %v1885
        %v1950 = vsel %vm1822, %v1610, %v1886
        %v1951 = vsel %vm1823, %v1613, %v1887
        %v1952 = vsel %vm1824, %v1618, %v1888
        %v1953 = vsel %vm1825, %v1621, %v1889
        %v1954 = vsel %vm1826, %v1626, %v1890
        %v1955 = vsel %vm1827, %v1629, %v1891
        %v1956 = vsel %vm1828, %v1634, %v1892
        %v1957 = vsel %vm1829, %v1637, %v1893
        %v1958 = vsel %vm1830, %v1642, %v1894
        %v1959 = vsel %vm1831, %v1645, %v1895
        %v1960 = vsel %vm1832, %v1650, %v1896
        %v1961 = vsel %vm1833, %v1653, %v1897
        %v1962 = vsel %vm1834, %v1658, %v1898
        %v1963 = vsel %vm1835, %v1661, %v1899
        %v1964 = vsel %vm1836, %v1666, %v1900
        %v1965 = vsel %vm1837, %v1669, %v1901
        %v1966 = vsel %vm1838, %v1674, %v1902
        %v1967 = vsel %vm1839, %v1677, %v1903
        %v1968 = vsel %vm1840, %v1682, %v1904
        %v1969 = vsel %vm1841, %v1685, %v1905
        %v1970 = vsel %vm1842, %v1690, %v1906
        %v1971 = vsel %vm1843, %v1693, %v1907
        %v1972 = vsel %vm1844, %v1698, %v1908
        %v1973 = vsel %vm1845, %v1701, %v1909
        %v1974 = vsel %vm1846, %v1706, %v1910
        %v1975 = vsel %vm1847, %v1709, %v1911
        %v1976 = vsel %vm1848, %v1714, %v1912
        %v1977 = vsel %vm1849, %v1717, %v1913
        %v1978 = vsel %vm1850, %v1722, %v1914
        %v1979 = vsel %vm1851, %v1725, %v1915
        %v1980 = vsel %vm1852, %v1730, %v1916
        %v1981 = vsel %vm1853, %v1733, %v1917
        %v1982 = vsel %vm1854, %v1738, %v1918
        %v1983 = vsel %vm1855, %v1741, %v1919
        %v1984 = vsel %vm1856, %v1746, %v1920
        %v1985 = vsel %vm1857, %v1749, %v1921
        %v1986 = vsel %vm1858, %v1754, %v1922
        %v1987 = vsel %vm1859, %v1757, %v1923
        %v1988 = vsel %vm1860, %v1762, %v1924
        %v1989 = vsel %vm1861, %v1765, %v1925
        %v1990 = vsel %vm1862, %v1770, %v1926
        %v1991 = vsel %vm1863, %v1773, %v1927
        %v1992 = vsel %vm1864, %v1778, %v1928
        %v1993 = vsel %vm1865, %v1781, %v1929
        %v1994 = vsel %vm1866, %v1786, %v1930
        %v1995 = vsel %vm1867, %v1789, %v1931
        %v1996 = vsel %vm1868, %v1794, %v1932
        %v1997 = vsel %vm1869, %v1797, %v1933
        %v1998 = vsel %vm1870, %v1802, %v1934
        %v1999 = vsel %vm1871, %v1805, %v1935
        %v2000 = vpack.c.bf16 %v1937, %v1936
        %v2001 = vpack.c.bf16 %v1939, %v1938
        %v2002 = vpack.c.bf16 %v1941, %v1940
        %v2003 = vpack.c.bf16 %v1943, %v1942
        %v2004 = vpack.c.bf16 %v1945, %v1944
        %v2005 = vpack.c.bf16 %v1947, %v1946
        %v2006 = vpack.c.bf16 %v1949, %v1948
        %v2007 = vpack.c.bf16 %v1951, %v1950
        %v2008 = vpack.c.bf16 %v1953, %v1952
        %v2009 = vpack.c.bf16 %v1955, %v1954
        %v2010 = vpack.c.bf16 %v1957, %v1956
        %v2011 = vpack.c.bf16 %v1959, %v1958
        %v2012 = vpack.c.bf16 %v1961, %v1960
        %v2013 = vpack.c.bf16 %v1963, %v1962
        %v2014 = vpack.c.bf16 %v1965, %v1964
        %v2015 = vpack.c.bf16 %v1967, %v1966
        %v2016 = vpack.c.bf16 %v1969, %v1968
        %v2017 = vpack.c.bf16 %v1971, %v1970
        %v2018 = vpack.c.bf16 %v1973, %v1972
        %v2019 = vpack.c.bf16 %v1975, %v1974
        %v2020 = vpack.c.bf16 %v1977, %v1976
        %v2021 = vpack.c.bf16 %v1979, %v1978
        %v2022 = vpack.c.bf16 %v1981, %v1980
        %v2023 = vpack.c.bf16 %v1983, %v1982
        %v2024 = vpack.c.bf16 %v1985, %v1984
        %v2025 = vpack.c.bf16 %v1987, %v1986
        %v2026 = vpack.c.bf16 %v1989, %v1988
        %v2027 = vpack.c.bf16 %v1991, %v1990
        %v2028 = vpack.c.bf16 %v1993, %v1992
        %v2029 = vpack.c.bf16 %v1995, %v1994
        %v2030 = vpack.c.bf16 %v1997, %v1996
        %v2031 = vpack.c.bf16 %v1999, %v1998
        %v2064 = vunpack.c.l.b16 %v2000
        %v2065 = vunpack.c.h.b16 %v2000
        %v2066 = vunpack.c.l.b16 %v2001
        %v2067 = vunpack.c.h.b16 %v2001
        %v2068 = vunpack.c.l.b16 %v2002
        %v2069 = vunpack.c.h.b16 %v2002
        %v2070 = vunpack.c.l.b16 %v2003
        %v2071 = vunpack.c.h.b16 %v2003
        %v2072 = vunpack.c.l.b16 %v2004
        %v2073 = vunpack.c.h.b16 %v2004
        %v2074 = vunpack.c.l.b16 %v2005
        %v2075 = vunpack.c.h.b16 %v2005
        %v2076 = vunpack.c.l.b16 %v2006
        %v2077 = vunpack.c.h.b16 %v2006
        %v2078 = vunpack.c.l.b16 %v2007
        %v2079 = vunpack.c.h.b16 %v2007
        %v2080 = vunpack.c.l.b16 %v2008
        %v2081 = vunpack.c.h.b16 %v2008
        %v2082 = vunpack.c.l.b16 %v2009
        %v2083 = vunpack.c.h.b16 %v2009
        %v2084 = vunpack.c.l.b16 %v2010
        %v2085 = vunpack.c.h.b16 %v2010
        %v2086 = vunpack.c.l.b16 %v2011
        %v2087 = vunpack.c.h.b16 %v2011
        %v2088 = vunpack.c.l.b16 %v2012
        %v2089 = vunpack.c.h.b16 %v2012
        %v2090 = vunpack.c.l.b16 %v2013
        %v2091 = vunpack.c.h.b16 %v2013
        %v2092 = vunpack.c.l.b16 %v2014
        %v2093 = vunpack.c.h.b16 %v2014
        %v2094 = vunpack.c.l.b16 %v2015
        %v2095 = vunpack.c.h.b16 %v2015
        %v2096 = vunpack.c.l.b16 %v2016
        %v2097 = vunpack.c.h.b16 %v2016
        %v2098 = vunpack.c.l.b16 %v2017
        %v2099 = vunpack.c.h.b16 %v2017
        %v2100 = vunpack.c.l.b16 %v2018
        %v2101 = vunpack.c.h.b16 %v2018
        %v2102 = vunpack.c.l.b16 %v2019
        %v2103 = vunpack.c.h.b16 %v2019
        %v2104 = vunpack.c.l.b16 %v2020
        %v2105 = vunpack.c.h.b16 %v2020
        %v2106 = vunpack.c.l.b16 %v2021
        %v2107 = vunpack.c.h.b16 %v2021
        %v2108 = vunpack.c.l.b16 %v2022
        %v2109 = vunpack.c.h.b16 %v2022
        %v2110 = vunpack.c.l.b16 %v2023
        %v2111 = vunpack.c.h.b16 %v2023
        %v2112 = vunpack.c.l.b16 %v2024
        %v2113 = vunpack.c.h.b16 %v2024
        %v2114 = vunpack.c.l.b16 %v2025
        %v2115 = vunpack.c.h.b16 %v2025
        %v2116 = vunpack.c.l.b16 %v2026
        %v2117 = vunpack.c.h.b16 %v2026
        %v2118 = vunpack.c.l.b16 %v2027
        %v2119 = vunpack.c.h.b16 %v2027
        %v2120 = vunpack.c.l.b16 %v2028
        %v2121 = vunpack.c.h.b16 %v2028
        %v2122 = vunpack.c.l.b16 %v2029
        %v2123 = vunpack.c.h.b16 %v2029
        %v2124 = vunpack.c.l.b16 %v2030
        %v2125 = vunpack.c.h.b16 %v2030
        %v2126 = vunpack.c.l.b16 %v2031
        %v2127 = vunpack.c.h.b16 %v2031
        %v2128 = vpack.c.b16 %v2064, %v2064
        %v2129 = vpack.c.b16 %v2065, %v2065
        %v2130 = vpack.c.b16 %v2066, %v2066
        %v2131 = vpack.c.b16 %v2067, %v2067
        %v2132 = vpack.c.b16 %v2068, %v2068
        %v2133 = vpack.c.b16 %v2069, %v2069
        %v2134 = vpack.c.b16 %v2070, %v2070
        %v2135 = vpack.c.b16 %v2071, %v2071
        %v2136 = vpack.c.b16 %v2072, %v2072
        %v2137 = vpack.c.b16 %v2073, %v2073
        %v2138 = vpack.c.b16 %v2074, %v2074
        %v2139 = vpack.c.b16 %v2075, %v2075
        %v2140 = vpack.c.b16 %v2076, %v2076
        %v2141 = vpack.c.b16 %v2077, %v2077
        %v2142 = vpack.c.b16 %v2078, %v2078
        %v2143 = vpack.c.b16 %v2079, %v2079
        %v2144 = vpack.c.b16 %v2080, %v2080
        %v2145 = vpack.c.b16 %v2081, %v2081
        %v2146 = vpack.c.b16 %v2082, %v2082
        %v2147 = vpack.c.b16 %v2083, %v2083
        %v2148 = vpack.c.b16 %v2084, %v2084
        %v2149 = vpack.c.b16 %v2085, %v2085
        %v2150 = vpack.c.b16 %v2086, %v2086
        %v2151 = vpack.c.b16 %v2087, %v2087
        %v2152 = vpack.c.b16 %v2088, %v2088
        %v2153 = vpack.c.b16 %v2089, %v2089
        %v2154 = vpack.c.b16 %v2090, %v2090
        %v2155 = vpack.c.b16 %v2091, %v2091
        %v2156 = vpack.c.b16 %v2092, %v2092
        %v2157 = vpack.c.b16 %v2093, %v2093
        %v2158 = vpack.c.b16 %v2094, %v2094
        %v2159 = vpack.c.b16 %v2095, %v2095
        %v2160 = vpack.c.b16 %v2096, %v2096
        %v2161 = vpack.c.b16 %v2097, %v2097
        %v2162 = vpack.c.b16 %v2098, %v2098
        %v2163 = vpack.c.b16 %v2099, %v2099
        %v2164 = vpack.c.b16 %v2100, %v2100
        %v2165 = vpack.c.b16 %v2101, %v2101
        %v2166 = vpack.c.b16 %v2102, %v2102
        %v2167 = vpack.c.b16 %v2103, %v2103
        %v2168 = vpack.c.b16 %v2104, %v2104
        %v2169 = vpack.c.b16 %v2105, %v2105
        %v2170 = vpack.c.b16 %v2106, %v2106
        %v2171 = vpack.c.b16 %v2107, %v2107
        %v2172 = vpack.c.b16 %v2108, %v2108
        %v2173 = vpack.c.b16 %v2109, %v2109
        %v2174 = vpack.c.b16 %v2110, %v2110
        %v2175 = vpack.c.b16 %v2111, %v2111
        %v2176 = vpack.c.b16 %v2112, %v2112
        %v2177 = vpack.c.b16 %v2113, %v2113
        %v2178 = vpack.c.b16 %v2114, %v2114
        %v2179 = vpack.c.b16 %v2115, %v2115
        %v2180 = vpack.c.b16 %v2116, %v2116
        %v2181 = vpack.c.b16 %v2117, %v2117
        %v2182 = vpack.c.b16 %v2118, %v2118
        %v2183 = vpack.c.b16 %v2119, %v2119
        %v2184 = vpack.c.b16 %v2120, %v2120
        %v2185 = vpack.c.b16 %v2121, %v2121
        %v2186 = vpack.c.b16 %v2122, %v2122
        %v2187 = vpack.c.b16 %v2123, %v2123
        %v2188 = vpack.c.b16 %v2124, %v2124
        %v2189 = vpack.c.b16 %v2125, %v2125
        %v2190 = vpack.c.b16 %v2126, %v2126
        %v2191 = vpack.c.b16 %v2127, %v2127
        %2256 = vst [vmem:[%s367] sm:$0xf] %v2128
        %2257 = vst [vmem:[%s367 + $0x4] sm:$0xf] %v2129
        %2258 = vst [vmem:[%s367 + $0x8] sm:$0xf] %v2130
        %2259 = vst [vmem:[%s367 + $0xc] sm:$0xf] %v2131
        %2260 = vst [vmem:[%s367 + $0x10] sm:$0xf] %v2132
        %2261 = vst [vmem:[%s367 + $0x14] sm:$0xf] %v2133
        %2262 = vst [vmem:[%s367 + $0x18] sm:$0xf] %v2134
        %2263 = vst [vmem:[%s367 + $0x1c] sm:$0xf] %v2135
        %2264 = vst [vmem:[%s367 + $0x20] sm:$0xf] %v2136
        %2265 = vst [vmem:[%s367 + $0x24] sm:$0xf] %v2137
        %2266 = vst [vmem:[%s367 + $0x28] sm:$0xf] %v2138
        %2267 = vst [vmem:[%s367 + $0x2c] sm:$0xf] %v2139
        %2268 = vst [vmem:[%s367 + $0x30] sm:$0xf] %v2140
        %2269 = vst [vmem:[%s367 + $0x34] sm:$0xf] %v2141
        %2270 = vst [vmem:[%s367 + $0x38] sm:$0xf] %v2142
        %2271 = vst [vmem:[%s367 + $0x3c] sm:$0xf] %v2143
        %2272 = vst [vmem:[%s367 + $0x40] sm:$0xf] %v2144
        %2273 = vst [vmem:[%s367 + $0x44] sm:$0xf] %v2145
        %2274 = vst [vmem:[%s367 + $0x48] sm:$0xf] %v2146
        %2275 = vst [vmem:[%s367 + $0x4c] sm:$0xf] %v2147
        %2276 = vst [vmem:[%s367 + $0x50] sm:$0xf] %v2148
        %2277 = vst [vmem:[%s367 + $0x54] sm:$0xf] %v2149
        %2278 = vst [vmem:[%s367 + $0x58] sm:$0xf] %v2150
        %2279 = vst [vmem:[%s367 + $0x5c] sm:$0xf] %v2151
        %2280 = vst [vmem:[%s367 + $0x60] sm:$0xf] %v2152
        %2281 = vst [vmem:[%s367 + $0x64] sm:$0xf] %v2153
        %2282 = vst [vmem:[%s367 + $0x68] sm:$0xf] %v2154
        %2283 = vst [vmem:[%s367 + $0x6c] sm:$0xf] %v2155
        %2284 = vst [vmem:[%s367 + $0x70] sm:$0xf] %v2156
        %2285 = vst [vmem:[%s367 + $0x74] sm:$0xf] %v2157
        %2286 = vst [vmem:[%s367 + $0x78] sm:$0xf] %v2158
        %2287 = vst [vmem:[%s367 + $0x7c] sm:$0xf] %v2159
        %2288 = vst [vmem:[%s367 + $0x80] sm:$0xf] %v2160
        %2289 = vst [vmem:[%s367 + $0x84] sm:$0xf] %v2161
        %2290 = vst [vmem:[%s367 + $0x88] sm:$0xf] %v2162
        %2291 = vst [vmem:[%s367 + $0x8c] sm:$0xf] %v2163
        %2292 = vst [vmem:[%s367 + $0x90] sm:$0xf] %v2164
        %2293 = vst [vmem:[%s367 + $0x94] sm:$0xf] %v2165
        %2294 = vst [vmem:[%s367 + $0x98] sm:$0xf] %v2166
        %2295 = vst [vmem:[%s367 + $0x9c] sm:$0xf] %v2167
        %2296 = vst [vmem:[%s367 + $0xa0] sm:$0xf] %v2168
        %2297 = vst [vmem:[%s367 + $0xa4] sm:$0xf] %v2169
        %2298 = vst [vmem:[%s367 + $0xa8] sm:$0xf] %v2170
        %2299 = vst [vmem:[%s367 + $0xac] sm:$0xf] %v2171
        %2300 = vst [vmem:[%s367 + $0xb0] sm:$0xf] %v2172
        %2301 = vst [vmem:[%s367 + $0xb4] sm:$0xf] %v2173
        %2302 = vst [vmem:[%s367 + $0xb8] sm:$0xf] %v2174
        %2303 = vst [vmem:[%s367 + $0xbc] sm:$0xf] %v2175
        %2304 = vst [vmem:[%s367 + $0xc0] sm:$0xf] %v2176
        %2305 = vst [vmem:[%s367 + $0xc4] sm:$0xf] %v2177
        %2306 = vst [vmem:[%s367 + $0xc8] sm:$0xf] %v2178
        %2307 = vst [vmem:[%s367 + $0xcc] sm:$0xf] %v2179
        %2308 = vst [vmem:[%s367 + $0xd0] sm:$0xf] %v2180
        %2309 = vst [vmem:[%s367 + $0xd4] sm:$0xf] %v2181
        %2310 = vst [vmem:[%s367 + $0xd8] sm:$0xf] %v2182
        %2311 = vst [vmem:[%s367 + $0xdc] sm:$0xf] %v2183
        %2312 = vst [vmem:[%s367 + $0xe0] sm:$0xf] %v2184
        %2313 = vst [vmem:[%s367 + $0xe4] sm:$0xf] %v2185
        %2314 = vst [vmem:[%s367 + $0xe8] sm:$0xf] %v2186
        %2315 = vst [vmem:[%s367 + $0xec] sm:$0xf] %v2187
        %2316 = vst [vmem:[%s367 + $0xf0] sm:$0xf] %v2188
        %2317 = vst [vmem:[%s367 + $0xf4] sm:$0xf] %v2189
        %2318 = vst [vmem:[%s367 + $0xf8] sm:$0xf] %v2190
        %2319 = vst [vmem:[%s367 + $0xfc] sm:$0xf] %v2191
        %v2320 = vld [vmem:[%s326] sm:$0xf]
        %v2321 = vlaneseq
        %v2322 = vshrl.u32 %v2321, 7
        %v2323 = vadd.s32 %v2322, 8
        %v2324 = vlaneseq
        %v2325 = vshrl.u32 %v2324, 7
        %v2326 = vsub.s32 0, %v2325
        %v2327 = vrot.slane %v2320, %v2326
        %v2328 = vlaneseq
        %v2329 = vshrl.u32 %v2328, 7
        %v2330 = vsub.s32 1, %v2329
        %v2331 = vrot.slane %v2320, %v2330
        %v2332 = vlaneseq
        %v2333 = vshrl.u32 %v2332, 7
        %v2334 = vsub.s32 2, %v2333
        %v2335 = vrot.slane %v2320, %v2334
        %v2336 = vlaneseq
        %v2337 = vshrl.u32 %v2336, 7
        %v2338 = vsub.s32 3, %v2337
        %v2339 = vrot.slane %v2320, %v2338
        %vm2340 = vcmp.eq.s32.totalorder %v2327, %v2322
        %vm2341 = vcmp.eq.s32.totalorder %v2331, %v2322
        %vm2342 = vcmp.eq.s32.totalorder %v2335, %v2322
        %vm2343 = vcmp.eq.s32.totalorder %v2339, %v2322
        %vm2344 = vcmp.eq.s32.totalorder %v2327, %v2323
        %vm2345 = vcmp.eq.s32.totalorder %v2331, %v2323
        %vm2346 = vcmp.eq.s32.totalorder %v2335, %v2323
        %vm2347 = vcmp.eq.s32.totalorder %v2339, %v2323
        %v2348 = vsel %vm2340, 1, 0
        %v2349 = vsel %vm2341, 1, 0
        %v2350 = vsel %vm2342, 1, 0
        %v2351 = vsel %vm2343, 1, 0
        %v2352 = vsel %vm2344, 1, 0
        %v2353 = vsel %vm2345, 1, 0
        %v2354 = vsel %vm2346, 1, 0
        %v2355 = vsel %vm2347, 1, 0
        %v2356 = vcvt.s32.f32 %v2348
        %v2357 = vcvt.s32.f32 %v2349
        %v2358 = vcvt.s32.f32 %v2350
        %v2359 = vcvt.s32.f32 %v2351
        %v2360 = vcvt.s32.f32 %v2352
        %v2361 = vcvt.s32.f32 %v2353
        %v2362 = vcvt.s32.f32 %v2354
        %v2363 = vcvt.s32.f32 %v2355
        %v2364 = vpack.c.bf16 %v2360, %v2356
        %v2365 = vpack.c.bf16 %v2361, %v2357
        %v2366 = vpack.c.bf16 %v2362, %v2358
        %v2367 = vpack.c.bf16 %v2363, %v2359
        %2368 = vmatprep.subr.bf16.mxu0 0
        %2369 = vmatpush1.bf16.msra.mxu0 %v2007
        %2370 = vmatprep.subr.bf16.mxu0 0
        %2371 = vmatpush1.bf16.msra.mxu0 %v2006
        %2372 = vmatprep.subr.bf16.mxu0 0
        %2373 = vmatpush1.bf16.msra.mxu0 %v2005
        %2374 = vmatprep.subr.bf16.mxu0 0
        %2375 = vmatpush1.bf16.msra.mxu0 %v2004
        %2376 = vmatprep.subr.bf16.mxu0 0
        %2377 = vmatpush1.bf16.msra.mxu0 %v2003
        %2378 = vmatprep.subr.bf16.mxu0 0
        %2379 = vmatpush1.bf16.msra.mxu0 %v2002
        %2380 = vmatprep.subr.bf16.mxu0 0
        %2381 = vmatpush1.bf16.msra.mxu0 %v2001
        %2382 = vmatprep.subr.bf16.mxu0 0
        %2383 = vmatpush1.bf16.msra.mxu0 %v2000
        %2384 = vmatprep.subr.bf16.mxu0 0
        %2385 = vmatpush2.bf16.msra.mxu0 %v2015
        %2386 = vmatprep.subr.bf16.mxu0 0
        %2387 = vmatpush2.bf16.msra.mxu0 %v2014
        %2388 = vmatprep.subr.bf16.mxu0 0
        %2389 = vmatpush2.bf16.msra.mxu0 %v2013
        %2390 = vmatprep.subr.bf16.mxu0 0
        %2391 = vmatpush2.bf16.msra.mxu0 %v2012
        %2392 = vmatprep.subr.bf16.mxu0 0
        %2393 = vmatpush2.bf16.msra.mxu0 %v2011
        %2394 = vmatprep.subr.bf16.mxu0 0
        %2395 = vmatpush2.bf16.msra.mxu0 %v2010
        %2396 = vmatprep.subr.bf16.mxu0 0
        %2397 = vmatpush2.bf16.msra.mxu0 %v2009
        %2398 = vmatprep.subr.bf16.mxu0 0
        %2399 = vmatpush2.bf16.msra.mxu0 %v2008
        %2400 = vmatprep.mubr.bf16.mxu0 %v2365
        %2401 = vmatmul.mubr.bf16.gmra.mxu0 %v2364
        %v2402 = vpop.f32.mrf.mxu0
        %v2403 = vadd.f32 0.0, %v2402
        %v2404 = vpop.f32.mrf.mxu0
        %v2405 = vpop.f32.mrf.mxu0
        %v2406 = vadd.f32 0.0, %v2405
        %v2407 = vpop.f32.mrf.mxu0
        %2408 = vdwg.mxu0
        %2409 = vmatprep.subr.bf16.mxu0 0
        %2410 = vmatpush1.bf16.msra.mxu0 %v2023
        %2411 = vmatprep.subr.bf16.mxu0 0
        %2412 = vmatpush1.bf16.msra.mxu0 %v2022
        %2413 = vmatprep.subr.bf16.mxu0 0
        %2414 = vmatpush1.bf16.msra.mxu0 %v2021
        %2415 = vmatprep.subr.bf16.mxu0 0
        %2416 = vmatpush1.bf16.msra.mxu0 %v2020
        %2417 = vmatprep.subr.bf16.mxu0 0
        %2418 = vmatpush1.bf16.msra.mxu0 %v2019
        %2419 = vmatprep.subr.bf16.mxu0 0
        %2420 = vmatpush1.bf16.msra.mxu0 %v2018
        %2421 = vmatprep.subr.bf16.mxu0 0
        %2422 = vmatpush1.bf16.msra.mxu0 %v2017
        %2423 = vmatprep.subr.bf16.mxu0 0
        %2424 = vmatpush1.bf16.msra.mxu0 %v2016
        %2425 = vmatprep.subr.bf16.mxu0 0
        %2426 = vmatpush2.bf16.msra.mxu0 %v2031
        %2427 = vmatprep.subr.bf16.mxu0 0
        %2428 = vmatpush2.bf16.msra.mxu0 %v2030
        %2429 = vmatprep.subr.bf16.mxu0 0
        %2430 = vmatpush2.bf16.msra.mxu0 %v2029
        %2431 = vmatprep.subr.bf16.mxu0 0
        %2432 = vmatpush2.bf16.msra.mxu0 %v2028
        %2433 = vmatprep.subr.bf16.mxu0 0
        %2434 = vmatpush2.bf16.msra.mxu0 %v2027
        %2435 = vmatprep.subr.bf16.mxu0 0
        %2436 = vmatpush2.bf16.msra.mxu0 %v2026
        %2437 = vmatprep.subr.bf16.mxu0 0
        %2438 = vmatpush2.bf16.msra.mxu0 %v2025
        %2439 = vmatprep.subr.bf16.mxu0 0
        %2440 = vmatpush2.bf16.msra.mxu0 %v2024
        %2441 = vmatprep.mubr.bf16.mxu0 %v2367
        %2442 = vmatmul.mubr.bf16.gmra.mxu0 %v2366
        %v2443 = vpop.f32.mrf.mxu0
        %v2444 = vadd.f32 %v2403, %v2443
        %v2445 = vpop.f32.mrf.mxu0
        %v2446 = vpop.f32.mrf.mxu0
        %v2447 = vadd.f32 %v2406, %v2446
        %v2448 = vpop.f32.mrf.mxu0
        %2449 = vdwg.mxu0
        %2450 = vst [vmem:[%s374] sm:$0xff] %v2444
        %2451 = vst [vmem:[%s374 + $0x8] sm:$0xf] %v2447
        %s2452 = sand.u32 %s176, 1
        %s2453 = scalar_lea.sflag [#allocation4], %s2452
        %s2454 = sand.u32 %s176, 1
        %s2455 = smul.addr %s2454, 256
        %s2456 = scalar_lea.vmem [#allocation10], %s2455
        %s2457 = sand.u32 %s202, 1
        %s2458 = scalar_lea.sflag [#allocation12], %s2457
        %s2459 = sand.u32 %s202, 1
        %s2460 = smul.addr %s2459, 16
        %s2461 = scalar_lea.vmem [#allocation11], %s2460
        // Predicated region
        $region61: #{tpu_custom_call.1} parent=43 // pred_check
          %p2462 = pneg %p186
        $region62: #{tpu_custom_call.1} parent=43 // pred_check_branch
          %2464 = sbr.rel (%p2462) target = $region64
        $region63: #{tpu_custom_call.1} parent=43 // pred_region
          %s2465 = smul.u32 64, %s32
          %s2467 = ssub.s32 4096, 4096
          %2468 = vsyncadd %s2453, %s2467
          %s2469 = smul.addr %s2465, 64
          %s2470 = scalar_lea.hbm %s6, %s2469
          %s2471 = sshll.u32 %s2456, 4
          %s2472 = int_to_ptr.vmem [resolvable:$true] %s2471
          %2477 = dma.vmem_to_hbm [thread:$0]  %s2472, 4096, %s2470, %s2453, 64, 64, 4
        $region64: #{tpu_custom_call.1} parent=43 // pred_fallthru
          _
        // Predicated region
        $region65: #{tpu_custom_call.1} parent=43 // pred_check
          %p2478 = pneg %p212
        $region66: #{tpu_custom_call.1} parent=43 // pred_check_branch
          %2480 = sbr.rel (%p2478) target = $region68
        $region67: #{tpu_custom_call.1} parent=43 // pred_region
          %s2482 = ssub.s32 256, 256
          %2483 = vsyncadd %s2458, %s2482
          %s2484 = smul.addr %s32, 2
          %s2485 = smul.addr %s2484, 128
          %s2486 = scalar_lea.hbm %s7, %s2485
          %s2487 = sshll.u32 %s2461, 4
          %s2488 = int_to_ptr.vmem [resolvable:$true] %s2487
          %2493 = dma.vmem_to_hbm [thread:$0]  %s2488, 256, %s2486, %s2458, 128, 128, 8
        $region68: #{tpu_custom_call.1} parent=43 // pred_fallthru
          _
      $region44: #{tpu_custom_call.1} parent=5 // pred_fallthru
        _
      %p2494 = scmp.le.s32.totalorder 2, %s27
      // Predicated region
      $region69: #{tpu_custom_call.1} parent=5 // pred_check
        %p2495 = pneg %p2494
      $region70: #{tpu_custom_call.1} parent=5 // pred_check_branch
        %2497 = sbr.rel (%p2495) target = $region72
      $region71: #{tpu_custom_call.1} parent=5 // pred_region
        %s2498 = ssub.s32 %s27, 2
        // Predicated region
        $region73: #{tpu_custom_call.1} parent=71 // pred_check
          %p2499 = pneg %p192
        $region74: #{tpu_custom_call.1} parent=71 // pred_check_branch
          %2501 = sbr.rel (%p2499) target = $region76
        $region75: #{tpu_custom_call.1} parent=71 // pred_region
          %s2502 = sand.u32 %s177, 1
          %s2503 = scalar_lea.sflag [#allocation4], %s2502
          %s2504 = sand.u32 %s177, 1
          %s2505 = smul.addr %s2504, 256
          %s2506 = scalar_lea.vmem [#allocation10], %s2505
          %2507 = dma.done %s2503, 4096
        $region76: #{tpu_custom_call.1} parent=71 // pred_fallthru
          _
        // Predicated region
        $region77: #{tpu_custom_call.1} parent=71 // pred_check
          %p2508 = pneg %p218
        $region78: #{tpu_custom_call.1} parent=71 // pred_check_branch
          %2510 = sbr.rel (%p2508) target = $region80
        $region79: #{tpu_custom_call.1} parent=71 // pred_region
          %s2511 = sand.u32 %s203, 1
          %s2512 = scalar_lea.sflag [#allocation12], %s2511
          %s2513 = sand.u32 %s203, 1
          %s2514 = smul.addr %s2513, 16
          %s2515 = scalar_lea.vmem [#allocation11], %s2514
          %2516 = dma.done %s2512, 256
        $region80: #{tpu_custom_call.1} parent=71 // pred_fallthru
          _
      $region72: #{tpu_custom_call.1} parent=5 // pred_fallthru
        _
    $region6: #{tpu_custom_call.1} parent=1 // loop_footer
      %s31 = sadd.s32 1, %s27
    $region7: #{tpu_custom_call.1} parent=1 // loop_footer_branch
      %26 = sbr.rel target = $region3
    $region8: #{tpu_custom_call.1} parent=1 // loop_exit
      _
    %2517 = vsyncpa [#allocation3], 1
    %s2518 = scalar_lea.sflag [#allocation3], 1
    %2519 = vsyncpa %s2518, 1
    %2520 = vsyncpa [#allocation6], 1
    %s2521 = scalar_lea.sflag [#allocation6], 1
    %2522 = vsyncpa %s2521, 1
    %2523 = vsyncpa [#allocation9], 1
    %2524 = vsyncpa [#allocation4], 1
    %s2525 = scalar_lea.sflag [#allocation4], 1
    %2526 = vsyncpa %s2525, 1
    %2527 = vsyncpa [#allocation12], 1
    %s2528 = scalar_lea.sflag [#allocation12], 1
    %2529 = vsyncpa %s2528, 1

</llo_original>
